<compile_context>
chip_gen: v5e
topology: v5e:2x2
jax: 0.10.0
libtpu: 0.0.40
codegen_flags: <defaults>
</compile_context>

<pallas_src>
import functools
import math

import jax
import jax.numpy as jnp
from jax.experimental import pallas as pl
from jax.experimental.pallas import tpu as pltpu

_F32 = jnp.float32
_BF16 = jnp.bfloat16


def _gelu_tanh(u):
    # TODO(synk): nn.GELU() default is the exact erf form; tanh approximation kept
    # (max abs error ~3e-4) since erf lowering is not guaranteed on Mosaic.
    c = 0.7978845608028654  # sqrt(2/pi)
    return 0.5 * u * (1.0 + jnp.tanh(c * (u + 0.044715 * u * u * u)))


def _layer_norm(x, gamma, beta, eps):
    mu = jnp.mean(x, axis=-1, keepdims=True)
    xc = x - mu
    var = jnp.mean(xc * xc, axis=-1, keepdims=True)
    return xc * jax.lax.rsqrt(var + eps) * gamma + beta


def _transformer_block_kernel(
    x_ref, g1_ref, b1_ref, wqkv_ref, bqkv_ref, wo_ref, bo_ref,
    g2_ref, b2_ref, w1_ref, bm1_ref, w2_ref, bm2_ref, o_ref,
    *, num_heads, seq_len, eps):
    x = x_ref[...].astype(_F32)                 # (Lp, E); batch dim squeezed by BlockSpec
    Lp, E = x.shape
    Dh = E // num_heads
    scale = 1.0 / math.sqrt(Dh)

    # ---- LayerNorm 1 (f32 VPU) + fused QKV projection (bf16 MXU, f32 accumulate) ----
    xn = _layer_norm(x, g1_ref[...], b1_ref[...], eps)
    qkv = jnp.dot(xn.astype(_BF16), wqkv_ref[...],
                  preferred_element_type=_F32) + bqkv_ref[...]
    qkv_b = qkv.astype(_BF16)                   # bf16 operands for the attention matmuls

    # Additive key mask for sequence padding (static; absent when Lp == seq_len).
    if Lp > seq_len:
        key_ids = jax.lax.broadcasted_iota(jnp.int32, (Lp, Lp), 1)
        key_mask = (key_ids >= seq_len).astype(_F32) * (-1e30)
    else:
        key_mask = None

    # ---- MHSA: per-head scores / softmax / context; the output projection is
    # accumulated per head (no concatenate), seeded with the residual + out bias.
    # TODO(synk): batch heads through a single 3-D dot_general once the
    # (L, H, Dh) -> (H, L, Dh) relayout is verified on Mosaic for sub-tile Dh.
    wo = wo_ref[...]                            # (E, E) bf16; per-head row slice is sublane-cheap
    acc = x + bo_ref[...]                       # f32 accumulator: residual + out-proj bias
    for h in range(num_heads):
        qh = qkv_b[:, h * Dh:(h + 1) * Dh]
        kh = qkv_b[:, E + h * Dh:E + (h + 1) * Dh]
        vh = qkv_b[:, 2 * E + h * Dh:2 * E + (h + 1) * Dh]
        s = jax.lax.dot_general(qh, kh, (((1,), (1,)), ((), ())),
                                preferred_element_type=_F32) * scale      # (Lp, Lp) f32
        if key_mask is not None:
            s = s + key_mask
        s = s - jnp.max(s, axis=-1, keepdims=True)
        p = jnp.exp(s)
        # Normalize on the EUP (approx reciprocal) instead of a VALU divide.
        p = p * pl.reciprocal(jnp.sum(p, axis=-1, keepdims=True), approx=True)
        ctx = jnp.dot(p.astype(_BF16), vh, preferred_element_type=_F32)   # (Lp, Dh)
        acc = acc + jnp.dot(ctx.astype(_BF16), wo[h * Dh:(h + 1) * Dh, :],
                            preferred_element_type=_F32)
    x1 = acc                                    # x + attention output (f32)

    # ---- LayerNorm 2 + MLP (fc1 -> GELU -> fc2); f32 elementwise, bf16 MXU inputs ----
    x1n = _layer_norm(x1, g2_ref[...], b2_ref[...], eps)
    hdn = jnp.dot(x1n.astype(_BF16), w1_ref[...],
                  preferred_element_type=_F32) + bm1_ref[...]
    hdn = _gelu_tanh(hdn)
    y = jnp.dot(hdn.astype(_BF16), w2_ref[...],
                preferred_element_type=_F32) + bm2_ref[...]
    o_ref[...] = (x1 + y).astype(o_ref.dtype)


def transformer_block(x, params, num_heads, eps=1e-5):
    """x: (L, N, E), seq-first (matching nn.MultiheadAttention's default layout).

    params: matmul-friendly layouts -- wqkv:(E,3E), wo:(E,E), w1:(E,M), w2:(M,E)
    stored in bf16 (MXU operands; f32 accumulation); LayerNorm params and biases in
    f32 with shape (1, dim)."""
    L, N, E = x.shape
    M = params["w1"].shape[1]
    Lp = ((L + 7) // 8) * 8                     # sublane-align the sequence tiles

    # Batch-major for the grid.
    # TODO(synk): keep activations batch-major across encoder layers so these two
    # HBM transposes are paid once per network instead of once per block.
    xb = jnp.transpose(x, (1, 0, 2))            # (N, L, E)
    if Lp != L:
        xb = jnp.pad(xb, ((0, 0), (0, Lp - L), (0, 0)))

    const = lambda b: (0, 0)
    kernel = functools.partial(_transformer_block_kernel,
                               num_heads=num_heads, seq_len=L, eps=eps)

    # VMEM budget: resident bf16 weights + f32 biases/LN params + double-buffered
    # activation tiles + in-kernel intermediates, 2x headroom, clamped to
    # [32 MiB, 100 MiB].  (v5e/v6e: 128 MiB physical; v7x: 64 MiB -- bf16 weights
    # keep the resident footprint inside it.)
    weight_bytes = 2 * (E * 3 * E + E * E + E * M + M * E)
    small_bytes = 4 * (3 * E + M + 7 * E)
    act_bytes = 2 * 2 * (4 * Lp * E)            # in + out tiles, double-buffered
    inter_bytes = 4 * (Lp * 3 * E + Lp * M + 3 * Lp * Lp + 4 * Lp * E)
    vmem_limit = int(min(100 * 2 ** 20,
                         max(32 * 2 ** 20,
                             2 * (weight_bytes + small_bytes + act_bytes + inter_bytes))))

    flops = N * (2 * Lp * E * 3 * E + 4 * Lp * Lp * E + 2 * Lp * E * E + 4 * Lp * E * M)
    transcendentals = N * (num_heads * (Lp * Lp + Lp) + Lp * M + 2 * Lp)
    bytes_accessed = 4 * 2 * N * Lp * E + weight_bytes + small_bytes

    out = pl.pallas_call(
        kernel,
        out_shape=jax.ShapeDtypeStruct((N, Lp, E), x.dtype),
        grid_spec=pltpu.PrefetchScalarGridSpec(
            num_scalar_prefetch=0,
            grid=(N,),
            in_specs=[
                pl.BlockSpec((None, Lp, E), lambda b: (b, 0, 0)),  # x tile (batch squeezed)
                pl.BlockSpec((1, E), const),        # norm1 gamma
                pl.BlockSpec((1, E), const),        # norm1 beta
                pl.BlockSpec((E, 3 * E), const),    # W_qkv  (bf16, resident)
                pl.BlockSpec((1, 3 * E), const),    # b_qkv
                pl.BlockSpec((E, E), const),        # W_out  (bf16, resident)
                pl.BlockSpec((1, E), const),        # b_out
                pl.BlockSpec((1, E), const),        # norm2 gamma
                pl.BlockSpec((1, E), const),        # norm2 beta
                pl.BlockSpec((E, M), const),        # W_fc1  (bf16, resident)
                pl.BlockSpec((1, M), const),        # b_fc1
                pl.BlockSpec((M, E), const),        # W_fc2  (bf16, resident)
                pl.BlockSpec((1, E), const),        # b_fc2
            ],
            out_specs=pl.BlockSpec((None, Lp, E), lambda b: (b, 0, 0)),
        ),
        compiler_params=pltpu.CompilerParams(
            dimension_semantics=("parallel",),      # N>=2 keeps both v7x TensorCores busy
            vmem_limit_bytes=vmem_limit,
        ),
        cost_estimate=pl.CostEstimate(
            flops=int(flops), transcendentals=int(transcendentals),
            bytes_accessed=int(bytes_accessed)),
    )(xb, params["g1"], params["b1"], params["wqkv"], params["bqkv"],
      params["wo"], params["bo"], params["g2"], params["b2"],
      params["w1"], params["bm1"], params["w2"], params["bm2"])

    if Lp != L:
        out = out[:, :L, :]
    return jnp.transpose(out, (1, 0, 2))


def _reference(x, p, num_heads, eps=1e-5):
    """Pure-JAX mirror of TransformerBlock.forward with the same mixed-precision
    recipe (bf16 MXU operands, f32 accumulation, tanh GELU)."""
    L, N, E = x.shape
    Dh = E // num_heads
    scale = 1.0 / math.sqrt(Dh)

    def ln(u, g, b):
        mu = u.mean(-1, keepdims=True)
        var = ((u - mu) ** 2).mean(-1, keepdims=True)
        return (u - mu) * jax.lax.rsqrt(var + eps) * g + b

    xn = ln(x, p["g1"], p["b1"])
    qkv = jnp.dot(xn.astype(_BF16), p["wqkv"].astype(_BF16),
                  preferred_element_type=_F32) + p["bqkv"]
    qkv = qkv.astype(_BF16)
    q, k, v = qkv[..., :E], qkv[..., E:2 * E], qkv[..., 2 * E:]

    def split(u):  # (L, N, E) -> (N, H, L, Dh)
        return u.reshape(L, N, num_heads, Dh).transpose(1, 2, 0, 3)

    qh, kh, vh = split(q), split(k), split(v)
    s = jnp.einsum("nhld,nhmd->nhlm", qh, kh, preferred_element_type=_F32) * scale
    a = jax.nn.softmax(s, axis=-1)
    ctx = jnp.einsum("nhlm,nhmd->nhld", a.astype(_BF16), vh,
                     preferred_element_type=_F32)
    ctx = ctx.transpose(2, 0, 1, 3).reshape(L, N, E)
    attn = jnp.dot(ctx.astype(_BF16), p["wo"].astype(_BF16),
                   preferred_element_type=_F32) + p["bo"]
    x1 = x + attn
    x1n = ln(x1, p["g2"], p["b2"])
    hdn = jnp.dot(x1n.astype(_BF16), p["w1"].astype(_BF16),
                  preferred_element_type=_F32) + p["bm1"]
    hdn = _gelu_tanh(hdn)
    y = jnp.dot(hdn.astype(_BF16), p["w2"].astype(_BF16),
                preferred_element_type=_F32) + p["bm2"]
    return x1 + y


if __name__ == "__main__":
    # Small shapes consistent with the module: seq=8, batch=2, embed_dim=32,
    # num_heads=4, mlp_dim=64.  x is (seq, batch, embed) per nn.MultiheadAttention.
    L, N, E = 8, 2, 32
    H, MLP = 4, 64

    key = jax.random.PRNGKey(0)
    ks = jax.random.split(key, 13)
    rn = lambda k, shape, s=0.2: s * jax.random.normal(k, shape, dtype=jnp.float32)

    x = jax.random.normal(ks[0], (L, N, E), dtype=jnp.float32)

    # PyTorch-native parameter layouts.
    in_proj_weight = rn(ks[1], (3 * E, E))     # attn.attention.in_proj_weight
    in_proj_bias = rn(ks[2], (3 * E,), 0.05)
    out_proj_weight = rn(ks[3], (E, E))        # attn.attention.out_proj.weight
    out_proj_bias = rn(ks[4], (E,), 0.05)
    fc1_weight = rn(ks[5], (MLP, E))           # mlp.fc1.weight  (out, in)
    fc1_bias = rn(ks[6], (MLP,), 0.05)
    fc2_weight = rn(ks[7], (E, MLP))           # mlp.fc2.weight
    fc2_bias = rn(ks[8], (E,), 0.05)
    g1 = 1.0 + rn(ks[9], (E,), 0.05)
    b1 = rn(ks[10], (E,), 0.05)
    g2 = 1.0 + rn(ks[11], (E,), 0.05)
    b2 = rn(ks[12], (E,), 0.05)

    # Matmul-friendly (in, out) layouts; big matmul weights stored in bf16 (MXU
    # operands, f32 accumulation), LN params / biases kept f32 for the VPU path.
    params = dict(
        g1=g1.reshape(1, E), b1=b1.reshape(1, E),
        wqkv=in_proj_weight.T.astype(jnp.bfloat16), bqkv=in_proj_bias.reshape(1, 3 * E),
        wo=out_proj_weight.T.astype(jnp.bfloat16), bo=out_proj_bias.reshape(1, E),
        g2=g2.reshape(1, E), b2=b2.reshape(1, E),
        w1=fc1_weight.T.astype(jnp.bfloat16), bm1=fc1_bias.reshape(1, MLP),
        w2=fc2_weight.T.astype(jnp.bfloat16), bm2=fc2_bias.reshape(1, E),
    )

    out = transformer_block(x, params, num_heads=H)
    out = jax.block_until_ready(out)

    ref = _reference(x, params, num_heads=H)
    assert out.shape == (L, N, E), out.shape
    max_err = float(jnp.max(jnp.abs(out - ref)))
    assert jnp.allclose(out, ref, atol=2e-2, rtol=2e-2), max_err

    print("KERNEL_OK")
</pallas_src>

<mosaic_0001>
module attributes {stable_mosaic.version = 11 : i64} {
  func.func @_transformer_block_kernel(%arg0: i32, %arg1: memref<1x8x32xf32, #tpu.memory_space<vmem>>, %arg2: memref<1x32xf32, #tpu.memory_space<vmem>>, %arg3: memref<1x32xf32, #tpu.memory_space<vmem>>, %arg4: memref<32x96xbf16, #tpu.memory_space<vmem>>, %arg5: memref<1x96xf32, #tpu.memory_space<vmem>>, %arg6: memref<32x32xbf16, #tpu.memory_space<vmem>>, %arg7: memref<1x32xf32, #tpu.memory_space<vmem>>, %arg8: memref<1x32xf32, #tpu.memory_space<vmem>>, %arg9: memref<1x32xf32, #tpu.memory_space<vmem>>, %arg10: memref<32x64xbf16, #tpu.memory_space<vmem>>, %arg11: memref<1x64xf32, #tpu.memory_space<vmem>>, %arg12: memref<64x32xbf16, #tpu.memory_space<vmem>>, %arg13: memref<1x32xf32, #tpu.memory_space<vmem>>, %arg14: memref<1x8x32xf32, #tpu.memory_space<vmem>>) attributes {dimension_semantics = [#tpu.dimension_semantics<parallel>], iteration_bounds = array<i64: 2>, scalar_prefetch = 0 : i64, scratch_operands = 0 : i64, tpu.core_type = #tpu.core_type<tc>, window_params = [{transform_indices = @transform_0, window_bounds = array<i64: 1, 8, 32>}, {pipeline_mode = #tpu.pipeline_mode<synchronous>, transform_indices = @transform_1, window_bounds = array<i64: 1, 32>}, {pipeline_mode = #tpu.pipeline_mode<synchronous>, transform_indices = @transform_2, window_bounds = array<i64: 1, 32>}, {pipeline_mode = #tpu.pipeline_mode<synchronous>, transform_indices = @transform_3, window_bounds = array<i64: 32, 96>}, {pipeline_mode = #tpu.pipeline_mode<synchronous>, transform_indices = @transform_4, window_bounds = array<i64: 1, 96>}, {pipeline_mode = #tpu.pipeline_mode<synchronous>, transform_indices = @transform_5, window_bounds = array<i64: 32, 32>}, {pipeline_mode = #tpu.pipeline_mode<synchronous>, transform_indices = @transform_6, window_bounds = array<i64: 1, 32>}, {pipeline_mode = #tpu.pipeline_mode<synchronous>, transform_indices = @transform_7, window_bounds = array<i64: 1, 32>}, {pipeline_mode = #tpu.pipeline_mode<synchronous>, transform_indices = @transform_8, window_bounds = array<i64: 1, 32>}, {pipeline_mode = #tpu.pipeline_mode<synchronous>, transform_indices = @transform_9, window_bounds = array<i64: 32, 64>}, {pipeline_mode = #tpu.pipeline_mode<synchronous>, transform_indices = @transform_10, window_bounds = array<i64: 1, 64>}, {pipeline_mode = #tpu.pipeline_mode<synchronous>, transform_indices = @transform_11, window_bounds = array<i64: 64, 32>}, {pipeline_mode = #tpu.pipeline_mode<synchronous>, transform_indices = @transform_12, window_bounds = array<i64: 1, 32>}, {transform_indices = @transform_13, window_bounds = array<i64: 1, 8, 32>}]} {
    %c0 = arith.constant 0 : index
    %c0_0 = arith.constant 0 : index
    %c0_1 = arith.constant 0 : index
    %0 = vector.load %arg1[%c0, %c0_0, %c0_1] : memref<1x8x32xf32, #tpu.memory_space<vmem>>, vector<1x8x32xf32>
    %1 = vector.shape_cast %0 : vector<1x8x32xf32> to vector<8x32xf32>
    %c0_2 = arith.constant 0 : index
    %c0_3 = arith.constant 0 : index
    %2 = vector.load %arg2[%c0_2, %c0_3] : memref<1x32xf32, #tpu.memory_space<vmem>>, vector<1x32xf32>
    %c0_4 = arith.constant 0 : index
    %c0_5 = arith.constant 0 : index
    %3 = vector.load %arg3[%c0_4, %c0_5] : memref<1x32xf32, #tpu.memory_space<vmem>>, vector<1x32xf32>
    %cst = arith.constant dense<0.000000e+00> : vector<8xf32>
    %4 = vector.multi_reduction <add>, %1, %cst [1] : vector<8x32xf32> to vector<8xf32>
    %5 = vector.shape_cast %4 : vector<8xf32> to vector<8x1xf32>
    %cst_6 = arith.constant 3.200000e+01 : f32
    %6 = vector.broadcast %cst_6 : f32 to vector<8x1xf32>
    %7 = arith.divf %5, %6 : vector<8x1xf32>
    %8 = vector.broadcast %7 : vector<8x1xf32> to vector<8x32xf32>
    %9 = arith.subf %1, %8 : vector<8x32xf32>
    %10 = arith.mulf %9, %9 : vector<8x32xf32>
    %cst_7 = arith.constant dense<0.000000e+00> : vector<8xf32>
    %11 = vector.multi_reduction <add>, %10, %cst_7 [1] : vector<8x32xf32> to vector<8xf32>
    %12 = vector.shape_cast %11 : vector<8xf32> to vector<8x1xf32>
    %cst_8 = arith.constant 3.200000e+01 : f32
    %13 = vector.broadcast %cst_8 : f32 to vector<8x1xf32>
    %14 = arith.divf %12, %13 : vector<8x1xf32>
    %cst_9 = arith.constant 9.99999974E-6 : f32
    %15 = vector.broadcast %cst_9 : f32 to vector<8x1xf32>
    %16 = arith.addf %14, %15 : vector<8x1xf32>
    %17 = math.rsqrt %16 : vector<8x1xf32>
    %18 = vector.broadcast %17 : vector<8x1xf32> to vector<8x32xf32>
    %19 = arith.mulf %9, %18 : vector<8x32xf32>
    %20 = vector.broadcast %2 : vector<1x32xf32> to vector<8x32xf32>
    %21 = arith.mulf %19, %20 : vector<8x32xf32>
    %22 = vector.broadcast %3 : vector<1x32xf32> to vector<8x32xf32>
    %23 = arith.addf %21, %22 : vector<8x32xf32>
    %24 = arith.truncf %23 : vector<8x32xf32> to vector<8x32xbf16>
    %c0_10 = arith.constant 0 : index
    %c0_11 = arith.constant 0 : index
    %25 = vector.load %arg4[%c0_10, %c0_11] : memref<32x96xbf16, #tpu.memory_space<vmem>>, vector<32x96xbf16>
    %cst_12 = arith.constant dense<0.000000e+00> : vector<8x96xf32>
    %26 = tpu.matmul %24, %25, %cst_12 {dimension_numbers = #tpu.dot_dimension_numbers<[1], [0], [0], [1], [0, 0, 1, 1], [], []>} : vector<8x32xbf16>, vector<32x96xbf16>, vector<8x96xf32> -> vector<8x96xf32>
    %c0_13 = arith.constant 0 : index
    %c0_14 = arith.constant 0 : index
    %27 = vector.load %arg5[%c0_13, %c0_14] : memref<1x96xf32, #tpu.memory_space<vmem>>, vector<1x96xf32>
    %28 = vector.broadcast %27 : vector<1x96xf32> to vector<8x96xf32>
    %29 = arith.addf %26, %28 : vector<8x96xf32>
    %30 = arith.truncf %29 : vector<8x96xf32> to vector<8x96xbf16>
    %c0_15 = arith.constant 0 : index
    %c0_16 = arith.constant 0 : index
    %31 = vector.load %arg6[%c0_15, %c0_16] : memref<32x32xbf16, #tpu.memory_space<vmem>>, vector<32x32xbf16>
    %c0_17 = arith.constant 0 : index
    %c0_18 = arith.constant 0 : index
    %32 = vector.load %arg7[%c0_17, %c0_18] : memref<1x32xf32, #tpu.memory_space<vmem>>, vector<1x32xf32>
    %33 = vector.broadcast %32 : vector<1x32xf32> to vector<8x32xf32>
    %34 = arith.addf %1, %33 : vector<8x32xf32>
    %35 = vector.extract_strided_slice %30 {offsets = [0, 0], sizes = [8, 8], strides = [1, 1]} : vector<8x96xbf16> to vector<8x8xbf16>
    %36 = vector.extract_strided_slice %30 {offsets = [0, 32], sizes = [8, 8], strides = [1, 1]} : vector<8x96xbf16> to vector<8x8xbf16>
    %37 = vector.extract_strided_slice %30 {offsets = [0, 64], sizes = [8, 8], strides = [1, 1]} : vector<8x96xbf16> to vector<8x8xbf16>
    %cst_19 = arith.constant dense<0.000000e+00> : vector<8x8xf32>
    %38 = tpu.matmul %35, %36, %cst_19 {dimension_numbers = #tpu.dot_dimension_numbers<[1], [1], [0], [0], [0, 0, 1, 0], [], []>} : vector<8x8xbf16>, vector<8x8xbf16>, vector<8x8xf32> -> vector<8x8xf32>
    %cst_20 = arith.constant 0.353553385 : f32
    %39 = vector.broadcast %cst_20 : f32 to vector<8x8xf32>
    %40 = arith.mulf %38, %39 : vector<8x8xf32>
    %cst_21 = arith.constant dense<0xFF800000> : vector<8xf32>
    %41 = vector.multi_reduction <maximumf>, %40, %cst_21 [1] : vector<8x8xf32> to vector<8xf32>
    %42 = vector.shape_cast %41 : vector<8xf32> to vector<8x1xf32>
    %43 = vector.broadcast %42 : vector<8x1xf32> to vector<8x8xf32>
    %44 = arith.subf %40, %43 : vector<8x8xf32>
    %45 = math.exp %44 : vector<8x8xf32>
    %cst_22 = arith.constant dense<0.000000e+00> : vector<8xf32>
    %46 = vector.multi_reduction <add>, %45, %cst_22 [1] : vector<8x8xf32> to vector<8xf32>
    %47 = vector.shape_cast %46 : vector<8xf32> to vector<8x1xf32>
    %48 = tpu.reciprocal %47 {approx = true} : vector<8x1xf32> -> vector<8x1xf32>
    %49 = vector.broadcast %48 : vector<8x1xf32> to vector<8x8xf32>
    %50 = arith.mulf %45, %49 : vector<8x8xf32>
    %51 = arith.truncf %50 : vector<8x8xf32> to vector<8x8xbf16>
    %cst_23 = arith.constant dense<0.000000e+00> : vector<8x8xf32>
    %52 = tpu.matmul %51, %37, %cst_23 {dimension_numbers = #tpu.dot_dimension_numbers<[1], [0], [0], [1], [0, 0, 1, 1], [], []>} : vector<8x8xbf16>, vector<8x8xbf16>, vector<8x8xf32> -> vector<8x8xf32>
    %53 = arith.truncf %52 : vector<8x8xf32> to vector<8x8xbf16>
    %54 = vector.extract_strided_slice %31 {offsets = [0, 0], sizes = [8, 32], strides = [1, 1]} : vector<32x32xbf16> to vector<8x32xbf16>
    %cst_24 = arith.constant dense<0.000000e+00> : vector<8x32xf32>
    %55 = tpu.matmul %53, %54, %cst_24 {dimension_numbers = #tpu.dot_dimension_numbers<[1], [0], [0], [1], [0, 0, 1, 1], [], []>} : vector<8x8xbf16>, vector<8x32xbf16>, vector<8x32xf32> -> vector<8x32xf32>
    %56 = arith.addf %34, %55 : vector<8x32xf32>
    %57 = vector.extract_strided_slice %30 {offsets = [0, 8], sizes = [8, 8], strides = [1, 1]} : vector<8x96xbf16> to vector<8x8xbf16>
    %58 = vector.extract_strided_slice %30 {offsets = [0, 40], sizes = [8, 8], strides = [1, 1]} : vector<8x96xbf16> to vector<8x8xbf16>
    %59 = vector.extract_strided_slice %30 {offsets = [0, 72], sizes = [8, 8], strides = [1, 1]} : vector<8x96xbf16> to vector<8x8xbf16>
    %cst_25 = arith.constant dense<0.000000e+00> : vector<8x8xf32>
    %60 = tpu.matmul %57, %58, %cst_25 {dimension_numbers = #tpu.dot_dimension_numbers<[1], [1], [0], [0], [0, 0, 1, 0], [], []>} : vector<8x8xbf16>, vector<8x8xbf16>, vector<8x8xf32> -> vector<8x8xf32>
    %cst_26 = arith.constant 0.353553385 : f32
    %61 = vector.broadcast %cst_26 : f32 to vector<8x8xf32>
    %62 = arith.mulf %60, %61 : vector<8x8xf32>
    %cst_27 = arith.constant dense<0xFF800000> : vector<8xf32>
    %63 = vector.multi_reduction <maximumf>, %62, %cst_27 [1] : vector<8x8xf32> to vector<8xf32>
    %64 = vector.shape_cast %63 : vector<8xf32> to vector<8x1xf32>
    %65 = vector.broadcast %64 : vector<8x1xf32> to vector<8x8xf32>
    %66 = arith.subf %62, %65 : vector<8x8xf32>
    %67 = math.exp %66 : vector<8x8xf32>
    %cst_28 = arith.constant dense<0.000000e+00> : vector<8xf32>
    %68 = vector.multi_reduction <add>, %67, %cst_28 [1] : vector<8x8xf32> to vector<8xf32>
    %69 = vector.shape_cast %68 : vector<8xf32> to vector<8x1xf32>
    %70 = tpu.reciprocal %69 {approx = true} : vector<8x1xf32> -> vector<8x1xf32>
    %71 = vector.broadcast %70 : vector<8x1xf32> to vector<8x8xf32>
    %72 = arith.mulf %67, %71 : vector<8x8xf32>
    %73 = arith.truncf %72 : vector<8x8xf32> to vector<8x8xbf16>
    %cst_29 = arith.constant dense<0.000000e+00> : vector<8x8xf32>
    %74 = tpu.matmul %73, %59, %cst_29 {dimension_numbers = #tpu.dot_dimension_numbers<[1], [0], [0], [1], [0, 0, 1, 1], [], []>} : vector<8x8xbf16>, vector<8x8xbf16>, vector<8x8xf32> -> vector<8x8xf32>
    %75 = arith.truncf %74 : vector<8x8xf32> to vector<8x8xbf16>
    %76 = vector.extract_strided_slice %31 {offsets = [8, 0], sizes = [8, 32], strides = [1, 1]} : vector<32x32xbf16> to vector<8x32xbf16>
    %cst_30 = arith.constant dense<0.000000e+00> : vector<8x32xf32>
    %77 = tpu.matmul %75, %76, %cst_30 {dimension_numbers = #tpu.dot_dimension_numbers<[1], [0], [0], [1], [0, 0, 1, 1], [], []>} : vector<8x8xbf16>, vector<8x32xbf16>, vector<8x32xf32> -> vector<8x32xf32>
    %78 = arith.addf %56, %77 : vector<8x32xf32>
    %79 = vector.extract_strided_slice %30 {offsets = [0, 16], sizes = [8, 8], strides = [1, 1]} : vector<8x96xbf16> to vector<8x8xbf16>
    %80 = vector.extract_strided_slice %30 {offsets = [0, 48], sizes = [8, 8], strides = [1, 1]} : vector<8x96xbf16> to vector<8x8xbf16>
    %81 = vector.extract_strided_slice %30 {offsets = [0, 80], sizes = [8, 8], strides = [1, 1]} : vector<8x96xbf16> to vector<8x8xbf16>
    %cst_31 = arith.constant dense<0.000000e+00> : vector<8x8xf32>
    %82 = tpu.matmul %79, %80, %cst_31 {dimension_numbers = #tpu.dot_dimension_numbers<[1], [1], [0], [0], [0, 0, 1, 0], [], []>} : vector<8x8xbf16>, vector<8x8xbf16>, vector<8x8xf32> -> vector<8x8xf32>
    %cst_32 = arith.constant 0.353553385 : f32
    %83 = vector.broadcast %cst_32 : f32 to vector<8x8xf32>
    %84 = arith.mulf %82, %83 : vector<8x8xf32>
    %cst_33 = arith.constant dense<0xFF800000> : vector<8xf32>
    %85 = vector.multi_reduction <maximumf>, %84, %cst_33 [1] : vector<8x8xf32> to vector<8xf32>
    %86 = vector.shape_cast %85 : vector<8xf32> to vector<8x1xf32>
    %87 = vector.broadcast %86 : vector<8x1xf32> to vector<8x8xf32>
    %88 = arith.subf %84, %87 : vector<8x8xf32>
    %89 = math.exp %88 : vector<8x8xf32>
    %cst_34 = arith.constant dense<0.000000e+00> : vector<8xf32>
    %90 = vector.multi_reduction <add>, %89, %cst_34 [1] : vector<8x8xf32> to vector<8xf32>
    %91 = vector.shape_cast %90 : vector<8xf32> to vector<8x1xf32>
    %92 = tpu.reciprocal %91 {approx = true} : vector<8x1xf32> -> vector<8x1xf32>
    %93 = vector.broadcast %92 : vector<8x1xf32> to vector<8x8xf32>
    %94 = arith.mulf %89, %93 : vector<8x8xf32>
    %95 = arith.truncf %94 : vector<8x8xf32> to vector<8x8xbf16>
    %cst_35 = arith.constant dense<0.000000e+00> : vector<8x8xf32>
    %96 = tpu.matmul %95, %81, %cst_35 {dimension_numbers = #tpu.dot_dimension_numbers<[1], [0], [0], [1], [0, 0, 1, 1], [], []>} : vector<8x8xbf16>, vector<8x8xbf16>, vector<8x8xf32> -> vector<8x8xf32>
    %97 = arith.truncf %96 : vector<8x8xf32> to vector<8x8xbf16>
    %98 = vector.extract_strided_slice %31 {offsets = [16, 0], sizes = [8, 32], strides = [1, 1]} : vector<32x32xbf16> to vector<8x32xbf16>
    %cst_36 = arith.constant dense<0.000000e+00> : vector<8x32xf32>
    %99 = tpu.matmul %97, %98, %cst_36 {dimension_numbers = #tpu.dot_dimension_numbers<[1], [0], [0], [1], [0, 0, 1, 1], [], []>} : vector<8x8xbf16>, vector<8x32xbf16>, vector<8x32xf32> -> vector<8x32xf32>
    %100 = arith.addf %78, %99 : vector<8x32xf32>
    %101 = vector.extract_strided_slice %30 {offsets = [0, 24], sizes = [8, 8], strides = [1, 1]} : vector<8x96xbf16> to vector<8x8xbf16>
    %102 = vector.extract_strided_slice %30 {offsets = [0, 56], sizes = [8, 8], strides = [1, 1]} : vector<8x96xbf16> to vector<8x8xbf16>
    %103 = vector.extract_strided_slice %30 {offsets = [0, 88], sizes = [8, 8], strides = [1, 1]} : vector<8x96xbf16> to vector<8x8xbf16>
    %cst_37 = arith.constant dense<0.000000e+00> : vector<8x8xf32>
    %104 = tpu.matmul %101, %102, %cst_37 {dimension_numbers = #tpu.dot_dimension_numbers<[1], [1], [0], [0], [0, 0, 1, 0], [], []>} : vector<8x8xbf16>, vector<8x8xbf16>, vector<8x8xf32> -> vector<8x8xf32>
    %cst_38 = arith.constant 0.353553385 : f32
    %105 = vector.broadcast %cst_38 : f32 to vector<8x8xf32>
    %106 = arith.mulf %104, %105 : vector<8x8xf32>
    %cst_39 = arith.constant dense<0xFF800000> : vector<8xf32>
    %107 = vector.multi_reduction <maximumf>, %106, %cst_39 [1] : vector<8x8xf32> to vector<8xf32>
    %108 = vector.shape_cast %107 : vector<8xf32> to vector<8x1xf32>
    %109 = vector.broadcast %108 : vector<8x1xf32> to vector<8x8xf32>
    %110 = arith.subf %106, %109 : vector<8x8xf32>
    %111 = math.exp %110 : vector<8x8xf32>
    %cst_40 = arith.constant dense<0.000000e+00> : vector<8xf32>
    %112 = vector.multi_reduction <add>, %111, %cst_40 [1] : vector<8x8xf32> to vector<8xf32>
    %113 = vector.shape_cast %112 : vector<8xf32> to vector<8x1xf32>
    %114 = tpu.reciprocal %113 {approx = true} : vector<8x1xf32> -> vector<8x1xf32>
    %115 = vector.broadcast %114 : vector<8x1xf32> to vector<8x8xf32>
    %116 = arith.mulf %111, %115 : vector<8x8xf32>
    %117 = arith.truncf %116 : vector<8x8xf32> to vector<8x8xbf16>
    %cst_41 = arith.constant dense<0.000000e+00> : vector<8x8xf32>
    %118 = tpu.matmul %117, %103, %cst_41 {dimension_numbers = #tpu.dot_dimension_numbers<[1], [0], [0], [1], [0, 0, 1, 1], [], []>} : vector<8x8xbf16>, vector<8x8xbf16>, vector<8x8xf32> -> vector<8x8xf32>
    %119 = arith.truncf %118 : vector<8x8xf32> to vector<8x8xbf16>
    %120 = vector.extract_strided_slice %31 {offsets = [24, 0], sizes = [8, 32], strides = [1, 1]} : vector<32x32xbf16> to vector<8x32xbf16>
    %cst_42 = arith.constant dense<0.000000e+00> : vector<8x32xf32>
    %121 = tpu.matmul %119, %120, %cst_42 {dimension_numbers = #tpu.dot_dimension_numbers<[1], [0], [0], [1], [0, 0, 1, 1], [], []>} : vector<8x8xbf16>, vector<8x32xbf16>, vector<8x32xf32> -> vector<8x32xf32>
    %122 = arith.addf %100, %121 : vector<8x32xf32>
    %c0_43 = arith.constant 0 : index
    %c0_44 = arith.constant 0 : index
    %123 = vector.load %arg8[%c0_43, %c0_44] : memref<1x32xf32, #tpu.memory_space<vmem>>, vector<1x32xf32>
    %c0_45 = arith.constant 0 : index
    %c0_46 = arith.constant 0 : index
    %124 = vector.load %arg9[%c0_45, %c0_46] : memref<1x32xf32, #tpu.memory_space<vmem>>, vector<1x32xf32>
    %cst_47 = arith.constant dense<0.000000e+00> : vector<8xf32>
    %125 = vector.multi_reduction <add>, %122, %cst_47 [1] : vector<8x32xf32> to vector<8xf32>
    %126 = vector.shape_cast %125 : vector<8xf32> to vector<8x1xf32>
    %cst_48 = arith.constant 3.200000e+01 : f32
    %127 = vector.broadcast %cst_48 : f32 to vector<8x1xf32>
    %128 = arith.divf %126, %127 : vector<8x1xf32>
    %129 = vector.broadcast %128 : vector<8x1xf32> to vector<8x32xf32>
    %130 = arith.subf %122, %129 : vector<8x32xf32>
    %131 = arith.mulf %130, %130 : vector<8x32xf32>
    %cst_49 = arith.constant dense<0.000000e+00> : vector<8xf32>
    %132 = vector.multi_reduction <add>, %131, %cst_49 [1] : vector<8x32xf32> to vector<8xf32>
    %133 = vector.shape_cast %132 : vector<8xf32> to vector<8x1xf32>
    %cst_50 = arith.constant 3.200000e+01 : f32
    %134 = vector.broadcast %cst_50 : f32 to vector<8x1xf32>
    %135 = arith.divf %133, %134 : vector<8x1xf32>
    %cst_51 = arith.constant 9.99999974E-6 : f32
    %136 = vector.broadcast %cst_51 : f32 to vector<8x1xf32>
    %137 = arith.addf %135, %136 : vector<8x1xf32>
    %138 = math.rsqrt %137 : vector<8x1xf32>
    %139 = vector.broadcast %138 : vector<8x1xf32> to vector<8x32xf32>
    %140 = arith.mulf %130, %139 : vector<8x32xf32>
    %141 = vector.broadcast %123 : vector<1x32xf32> to vector<8x32xf32>
    %142 = arith.mulf %140, %141 : vector<8x32xf32>
    %143 = vector.broadcast %124 : vector<1x32xf32> to vector<8x32xf32>
    %144 = arith.addf %142, %143 : vector<8x32xf32>
    %145 = arith.truncf %144 : vector<8x32xf32> to vector<8x32xbf16>
    %c0_52 = arith.constant 0 : index
    %c0_53 = arith.constant 0 : index
    %146 = vector.load %arg10[%c0_52, %c0_53] : memref<32x64xbf16, #tpu.memory_space<vmem>>, vector<32x64xbf16>
    %cst_54 = arith.constant dense<0.000000e+00> : vector<8x64xf32>
    %147 = tpu.matmul %145, %146, %cst_54 {dimension_numbers = #tpu.dot_dimension_numbers<[1], [0], [0], [1], [0, 0, 1, 1], [], []>} : vector<8x32xbf16>, vector<32x64xbf16>, vector<8x64xf32> -> vector<8x64xf32>
    %c0_55 = arith.constant 0 : index
    %c0_56 = arith.constant 0 : index
    %148 = vector.load %arg11[%c0_55, %c0_56] : memref<1x64xf32, #tpu.memory_space<vmem>>, vector<1x64xf32>
    %149 = vector.broadcast %148 : vector<1x64xf32> to vector<8x64xf32>
    %150 = arith.addf %147, %149 : vector<8x64xf32>
    %cst_57 = arith.constant 5.000000e-01 : f32
    %151 = vector.broadcast %cst_57 : f32 to vector<8x64xf32>
    %152 = arith.mulf %151, %150 : vector<8x64xf32>
    %cst_58 = arith.constant 4.471500e-02 : f32
    %153 = vector.broadcast %cst_58 : f32 to vector<8x64xf32>
    %154 = arith.mulf %153, %150 : vector<8x64xf32>
    %155 = arith.mulf %154, %150 : vector<8x64xf32>
    %156 = arith.mulf %155, %150 : vector<8x64xf32>
    %157 = arith.addf %150, %156 : vector<8x64xf32>
    %cst_59 = arith.constant 0.797884583 : f32
    %158 = vector.broadcast %cst_59 : f32 to vector<8x64xf32>
    %159 = arith.mulf %158, %157 : vector<8x64xf32>
    %160 = math.tanh %159 : vector<8x64xf32>
    %cst_60 = arith.constant 1.000000e+00 : f32
    %161 = vector.broadcast %cst_60 : f32 to vector<8x64xf32>
    %162 = arith.addf %161, %160 : vector<8x64xf32>
    %163 = arith.mulf %152, %162 : vector<8x64xf32>
    %164 = arith.truncf %163 : vector<8x64xf32> to vector<8x64xbf16>
    %c0_61 = arith.constant 0 : index
    %c0_62 = arith.constant 0 : index
    %165 = vector.load %arg12[%c0_61, %c0_62] : memref<64x32xbf16, #tpu.memory_space<vmem>>, vector<64x32xbf16>
    %cst_63 = arith.constant dense<0.000000e+00> : vector<8x32xf32>
    %166 = tpu.matmul %164, %165, %cst_63 {dimension_numbers = #tpu.dot_dimension_numbers<[1], [0], [0], [1], [0, 0, 1, 1], [], []>} : vector<8x64xbf16>, vector<64x32xbf16>, vector<8x32xf32> -> vector<8x32xf32>
    %c0_64 = arith.constant 0 : index
    %c0_65 = arith.constant 0 : index
    %167 = vector.load %arg13[%c0_64, %c0_65] : memref<1x32xf32, #tpu.memory_space<vmem>>, vector<1x32xf32>
    %168 = vector.broadcast %167 : vector<1x32xf32> to vector<8x32xf32>
    %169 = arith.addf %166, %168 : vector<8x32xf32>
    %170 = arith.addf %122, %169 : vector<8x32xf32>
    %c0_66 = arith.constant 0 : index
    %c0_67 = arith.constant 0 : index
    %c0_68 = arith.constant 0 : index
    %171 = vector.load %arg14[%c0_66, %c0_67, %c0_68] : memref<1x8x32xf32, #tpu.memory_space<vmem>>, vector<1x8x32xf32>
    %172 = vector.shape_cast %171 : vector<1x8x32xf32> to vector<8x32xf32>
    %173 = vector.shape_cast %170 : vector<8x32xf32> to vector<1x8x32xf32>
    tpu.vector_store %arg14[%c0_66, %c0_67, %c0_68], %173 {strides = array<i32>} : memref<1x8x32xf32, #tpu.memory_space<vmem>>, vector<1x8x32xf32>,
    return
  }
  func.func @transform_0(%arg0: i32) -> (i32, i32, i32) {
    %c0_i32 = arith.constant 0 : i32
    %c0_i32_0 = arith.constant 0 : i32
    %c0_i32_1 = arith.constant 0 : i32
    return %arg0, %c0_i32, %c0_i32_0 : i32, i32, i32
  }
  func.func @transform_1(%arg0: i32) -> (i32, i32) {
    %c0_i32 = arith.constant 0 : i32
    %c0_i32_0 = arith.constant 0 : i32
    %c0_i32_1 = arith.constant 0 : i32
    return %c0_i32, %c0_i32_0 : i32, i32
  }
  func.func @transform_2(%arg0: i32) -> (i32, i32) {
    %c0_i32 = arith.constant 0 : i32
    %c0_i32_0 = arith.constant 0 : i32
    %c0_i32_1 = arith.constant 0 : i32
    return %c0_i32, %c0_i32_0 : i32, i32
  }
  func.func @transform_3(%arg0: i32) -> (i32, i32) {
    %c0_i32 = arith.constant 0 : i32
    %c0_i32_0 = arith.constant 0 : i32
    %c0_i32_1 = arith.constant 0 : i32
    return %c0_i32, %c0_i32_0 : i32, i32
  }
  func.func @transform_4(%arg0: i32) -> (i32, i32) {
    %c0_i32 = arith.constant 0 : i32
    %c0_i32_0 = arith.constant 0 : i32
    %c0_i32_1 = arith.constant 0 : i32
    return %c0_i32, %c0_i32_0 : i32, i32
  }
  func.func @transform_5(%arg0: i32) -> (i32, i32) {
    %c0_i32 = arith.constant 0 : i32
    %c0_i32_0 = arith.constant 0 : i32
    %c0_i32_1 = arith.constant 0 : i32
    return %c0_i32, %c0_i32_0 : i32, i32
  }
  func.func @transform_6(%arg0: i32) -> (i32, i32) {
    %c0_i32 = arith.constant 0 : i32
    %c0_i32_0 = arith.constant 0 : i32
    %c0_i32_1 = arith.constant 0 : i32
    return %c0_i32, %c0_i32_0 : i32, i32
  }
  func.func @transform_7(%arg0: i32) -> (i32, i32) {
    %c0_i32 = arith.constant 0 : i32
    %c0_i32_0 = arith.constant 0 : i32
    %c0_i32_1 = arith.constant 0 : i32
    return %c0_i32, %c0_i32_0 : i32, i32
  }
  func.func @transform_8(%arg0: i32) -> (i32, i32) {
    %c0_i32 = arith.constant 0 : i32
    %c0_i32_0 = arith.constant 0 : i32
    %c0_i32_1 = arith.constant 0 : i32
    return %c0_i32, %c0_i32_0 : i32, i32
  }
  func.func @transform_9(%arg0: i32) -> (i32, i32) {
    %c0_i32 = arith.constant 0 : i32
    %c0_i32_0 = arith.constant 0 : i32
    %c0_i32_1 = arith.constant 0 : i32
    return %c0_i32, %c0_i32_0 : i32, i32
  }
  func.func @transform_10(%arg0: i32) -> (i32, i32) {
    %c0_i32 = arith.constant 0 : i32
    %c0_i32_0 = arith.constant 0 : i32
    %c0_i32_1 = arith.constant 0 : i32
    return %c0_i32, %c0_i32_0 : i32, i32
  }
  func.func @transform_11(%arg0: i32) -> (i32, i32) {
    %c0_i32 = arith.constant 0 : i32
    %c0_i32_0 = arith.constant 0 : i32
    %c0_i32_1 = arith.constant 0 : i32
    return %c0_i32, %c0_i32_0 : i32, i32
  }
  func.func @transform_12(%arg0: i32) -> (i32, i32) {
    %c0_i32 = arith.constant 0 : i32
    %c0_i32_0 = arith.constant 0 : i32
    %c0_i32_1 = arith.constant 0 : i32
    return %c0_i32, %c0_i32_0 : i32, i32
  }
  func.func @transform_13(%arg0: i32) -> (i32, i32, i32) {
    %c0_i32 = arith.constant 0 : i32
    %c0_i32_0 = arith.constant 0 : i32
    %c0_i32_1 = arith.constant 0 : i32
    return %arg0, %c0_i32, %c0_i32_0 : i32, i32, i32
  }
}

</mosaic_0001>

<llo_original>
// kernel: tpu_custom_call.1
$region0: #{tpu_custom_call.1}
  #allocation0 [shape = 'u32[]', space=smem, size = 0x4, offset = 0x4, fixed_abs, tag = 'smem constant byte address 0x4 - core index']
  #allocation1 [shape = 'u32[72,128]{1,0:T(1,128)}', space=vmem, size = 0x9000, scoped, tag = 'internal scratch']
  %s0 = inlined_call_operand.vmem [shape: f32[2,8,32], index: 0, kind: input, shape index: {}]
  %s1 = inlined_call_operand.hbm [shape: f32[1,32], index: 1, kind: input, shape index: {}]
  %s2 = inlined_call_operand.vmem [shape: f32[1,32], index: 2, kind: input, shape index: {}]
  %s3 = inlined_call_operand.vmem [shape: bf16[32,96], index: 3, kind: input, shape index: {}]
  %s4 = inlined_call_operand.vmem [shape: f32[1,96], index: 4, kind: input, shape index: {}]
  %s5 = inlined_call_operand.vmem [shape: bf16[32,32], index: 5, kind: input, shape index: {}]
  %s6 = inlined_call_operand.vmem [shape: f32[1,32], index: 6, kind: input, shape index: {}]
  %s7 = inlined_call_operand.vmem [shape: f32[1,32], index: 7, kind: input, shape index: {}]
  %s8 = inlined_call_operand.vmem [shape: f32[1,32], index: 8, kind: input, shape index: {}]
  %s9 = inlined_call_operand.hbm [shape: bf16[32,64], index: 9, kind: input, shape index: {}]
  %s10 = inlined_call_operand.vmem [shape: f32[1,64], index: 10, kind: input, shape index: {}]
  %s11 = inlined_call_operand.vmem [shape: bf16[64,32], index: 11, kind: input, shape index: {}]
  %s12 = inlined_call_operand.vmem [shape: f32[1,32], index: 12, kind: input, shape index: {}]
  %s13 = inlined_call_operand.hbm [shape: f32[2,8,32], index: 13, kind: output, shape index: {}]
  %s14 = sld [smem:[#allocation0]]
  $region93: #{tpu_custom_call.1} parent=0
    _
  %s16 = ssub.s32 1, %s14
  %s17 = scalar_select 0, %s16, %s14
  $region1: #{tpu_custom_call.1} parent=0
    #allocation2 [shape = 'u8[512]{0}', space=vmem, size = 0x400, scoped, tag = 'input window, operand 1, single buffered']
    #allocation3 [shape = 's32[2]{0}', space=sflag, size = 0x8, scoped, tag = 'scoped memory for tpu_custom_call.1']
    #allocation4 [shape = 's32[2]{0}', space=sflag, size = 0x8, scoped, tag = 'scoped memory for tpu_custom_call.1']
    #allocation5 [shape = 'u8[8192]{0}', space=vmem, size = 0x2000, scoped, tag = 'input window, operand 9, single buffered']
    #allocation6 [shape = 's32[1]{0}', space=sflag, size = 0x4, scoped, tag = 'scoped memory for tpu_custom_call.1']
    #allocation7 [shape = 'u8[8192]{0}', space=vmem, size = 0x2000, scoped, tag = 'output window, operand 0']
    %18 = vsyncpa [#allocation3], 0
    %19 = vsyncpa [#allocation6], 0
    %20 = vsyncpa [#allocation4], 0
    %s21 = scalar_lea.sflag [#allocation4], 1
    %22 = vsyncpa %s21, 0
    loop: start=0, step=1, limit=4
    $region2: #{tpu_custom_call.1} parent=1 // loop_pre_header
      _
    $region3: #{tpu_custom_call.1} parent=1 // loop_header
      %s24 = sphi 0, %s28
      %p25 = scmp.ge.s32.totalorder %s24, 4
      %s34 = sphi 0, %s36
      %s37 = sphi 0, %s34
      %s38 = sphi 0, %s37
      %s54 = sphi 0, %s38
      %s58 = sphi 0, %s58
      %s60 = sphi 0, %s58
      %s61 = sphi 0, %s60
      %s75 = sphi 0, %s61
      %s79 = sphi 0, %s79
      %s81 = sphi 0, %s79
      %s82 = sphi 0, %s81
      %s96 = sphi 0, %s82
      %s100 = sphi 0, %s100
      %s102 = sphi 0, %s100
      %s103 = sphi 0, %s102
      %s117 = sphi 0, %s103
      %s121 = sphi 0, %s121
      %s123 = sphi 0, %s121
      %s124 = sphi 0, %s123
      %s138 = sphi 0, %s124
      %s142 = sphi 0, %s142
      %s144 = sphi 0, %s142
      %s145 = sphi 0, %s144
      %s159 = sphi 0, %s145
      %s163 = sphi 0, %s163
      %s165 = sphi 0, %s163
      %s166 = sphi 0, %s165
      %s180 = sphi 0, %s166
      %s184 = sphi 0, %s184
      %s186 = sphi 0, %s184
      %s187 = sphi 0, %s186
      %s201 = sphi 0, %s187
      %s205 = sphi 0, %s205
      %s207 = sphi 0, %s205
      %s208 = sphi 0, %s207
      %s222 = sphi 0, %s208
      %s226 = sphi 0, %s226
      %s228 = sphi 0, %s226
      %s229 = sphi 0, %s228
      %s243 = sphi 0, %s229
      %s247 = sphi 0, %s247
      %s249 = sphi 0, %s247
      %s250 = sphi 0, %s249
      %s264 = sphi 0, %s250
      %s268 = sphi 0, %s268
      %s270 = sphi 0, %s268
      %s271 = sphi 0, %s270
      %s285 = sphi 0, %s271
      %s289 = sphi 0, %s289
      %s291 = sphi 0, %s289
      %s292 = sphi 0, %s291
      %s306 = sphi 0, %s292
      %s312 = sphi 0, %s314
      %s315 = sphi 0, %s312
      %s316 = sphi 0, %s315
      %s332 = sphi 0, %s316
    $region4: #{tpu_custom_call.1} parent=1 // loop_header_branch
      %27 = sbr.rel (%p25) target = $region8
    $region5: #{tpu_custom_call.1} parent=1 // loop_body
      %s29 = ssub.s32 %s24, 1
      %s30 = ssub.s32 %s24, 2
      %s31 = sadd.s32 %s24, 1
      %s32 = ssub.s32 %s24, %s31
      %p33 = scmp.eq.s32.totalorder %s32, 0
      %s35 = sadd.s32 %s34, 1
      %s36 = scalar_select %p33, %s34, %s35
      %p39 = pneg %p33
      %p40 = scmp.eq.s32.totalorder %s24, 1
      %p41 = por %p39, %p40
      %p42 = scmp.ne.s32.totalorder %s34, %s37
      %p43 = scmp.eq.s32.totalorder %s24, 0
      %p44 = por %p42, %p43
      %p45 = scmp.ne.s32.totalorder %s34, %s37
      %p46 = scmp.eq.s32.totalorder %s29, 1
      %p47 = por %p45, %p46
      %p48 = scmp.ne.s32.totalorder %s37, %s38
      %p49 = scmp.eq.s32.totalorder %s29, 0
      %p50 = por %p48, %p49
      %p51 = scmp.ne.s32.totalorder %s37, %s38
      %p52 = scmp.eq.s32.totalorder %s30, 1
      %p53 = por %p51, %p52
      %p55 = scmp.ne.s32.totalorder %s38, %s54
      %p56 = scmp.eq.s32.totalorder %s30, 0
      %p57 = por %p55, %p56
      %s59 = sadd.s32 %s58, 1
      %p62 = scmp.eq.s32.totalorder %s24, 1
      %p63 = scmp.ne.s32.totalorder %s58, %s60
      %p64 = scmp.eq.s32.totalorder %s24, 0
      %p65 = por %p63, %p64
      %p66 = scmp.ne.s32.totalorder %s58, %s60
      %p67 = scmp.eq.s32.totalorder %s29, 1
      %p68 = por %p66, %p67
      %p69 = scmp.ne.s32.totalorder %s60, %s61
      %p70 = scmp.eq.s32.totalorder %s29, 0
      %p71 = por %p69, %p70
      %p72 = scmp.ne.s32.totalorder %s60, %s61
      %p73 = scmp.eq.s32.totalorder %s30, 1
      %p74 = por %p72, %p73
      %p76 = scmp.ne.s32.totalorder %s61, %s75
      %p77 = scmp.eq.s32.totalorder %s30, 0
      %p78 = por %p76, %p77
      %s80 = sadd.s32 %s79, 1
      %p83 = scmp.eq.s32.totalorder %s24, 1
      %p84 = scmp.ne.s32.totalorder %s79, %s81
      %p85 = scmp.eq.s32.totalorder %s24, 0
      %p86 = por %p84, %p85
      %p87 = scmp.ne.s32.totalorder %s79, %s81
      %p88 = scmp.eq.s32.totalorder %s29, 1
      %p89 = por %p87, %p88
      %p90 = scmp.ne.s32.totalorder %s81, %s82
      %p91 = scmp.eq.s32.totalorder %s29, 0
      %p92 = por %p90, %p91
      %p93 = scmp.ne.s32.totalorder %s81, %s82
      %p94 = scmp.eq.s32.totalorder %s30, 1
      %p95 = por %p93, %p94
      %p97 = scmp.ne.s32.totalorder %s82, %s96
      %p98 = scmp.eq.s32.totalorder %s30, 0
      %p99 = por %p97, %p98
      %s101 = sadd.s32 %s100, 1
      %p104 = scmp.eq.s32.totalorder %s24, 1
      %p105 = scmp.ne.s32.totalorder %s100, %s102
      %p106 = scmp.eq.s32.totalorder %s24, 0
      %p107 = por %p105, %p106
      %p108 = scmp.ne.s32.totalorder %s100, %s102
      %p109 = scmp.eq.s32.totalorder %s29, 1
      %p110 = por %p108, %p109
      %p111 = scmp.ne.s32.totalorder %s102, %s103
      %p112 = scmp.eq.s32.totalorder %s29, 0
      %p113 = por %p111, %p112
      %p114 = scmp.ne.s32.totalorder %s102, %s103
      %p115 = scmp.eq.s32.totalorder %s30, 1
      %p116 = por %p114, %p115
      %p118 = scmp.ne.s32.totalorder %s103, %s117
      %p119 = scmp.eq.s32.totalorder %s30, 0
      %p120 = por %p118, %p119
      %s122 = sadd.s32 %s121, 1
      %p125 = scmp.eq.s32.totalorder %s24, 1
      %p126 = scmp.ne.s32.totalorder %s121, %s123
      %p127 = scmp.eq.s32.totalorder %s24, 0
      %p128 = por %p126, %p127
      %p129 = scmp.ne.s32.totalorder %s121, %s123
      %p130 = scmp.eq.s32.totalorder %s29, 1
      %p131 = por %p129, %p130
      %p132 = scmp.ne.s32.totalorder %s123, %s124
      %p133 = scmp.eq.s32.totalorder %s29, 0
      %p134 = por %p132, %p133
      %p135 = scmp.ne.s32.totalorder %s123, %s124
      %p136 = scmp.eq.s32.totalorder %s30, 1
      %p137 = por %p135, %p136
      %p139 = scmp.ne.s32.totalorder %s124, %s138
      %p140 = scmp.eq.s32.totalorder %s30, 0
      %p141 = por %p139, %p140
      %s143 = sadd.s32 %s142, 1
      %p146 = scmp.eq.s32.totalorder %s24, 1
      %p147 = scmp.ne.s32.totalorder %s142, %s144
      %p148 = scmp.eq.s32.totalorder %s24, 0
      %p149 = por %p147, %p148
      %p150 = scmp.ne.s32.totalorder %s142, %s144
      %p151 = scmp.eq.s32.totalorder %s29, 1
      %p152 = por %p150, %p151
      %p153 = scmp.ne.s32.totalorder %s144, %s145
      %p154 = scmp.eq.s32.totalorder %s29, 0
      %p155 = por %p153, %p154
      %p156 = scmp.ne.s32.totalorder %s144, %s145
      %p157 = scmp.eq.s32.totalorder %s30, 1
      %p158 = por %p156, %p157
      %p160 = scmp.ne.s32.totalorder %s145, %s159
      %p161 = scmp.eq.s32.totalorder %s30, 0
      %p162 = por %p160, %p161
      %s164 = sadd.s32 %s163, 1
      %p167 = scmp.eq.s32.totalorder %s24, 1
      %p168 = scmp.ne.s32.totalorder %s163, %s165
      %p169 = scmp.eq.s32.totalorder %s24, 0
      %p170 = por %p168, %p169
      %p171 = scmp.ne.s32.totalorder %s163, %s165
      %p172 = scmp.eq.s32.totalorder %s29, 1
      %p173 = por %p171, %p172
      %p174 = scmp.ne.s32.totalorder %s165, %s166
      %p175 = scmp.eq.s32.totalorder %s29, 0
      %p176 = por %p174, %p175
      %p177 = scmp.ne.s32.totalorder %s165, %s166
      %p178 = scmp.eq.s32.totalorder %s30, 1
      %p179 = por %p177, %p178
      %p181 = scmp.ne.s32.totalorder %s166, %s180
      %p182 = scmp.eq.s32.totalorder %s30, 0
      %p183 = por %p181, %p182
      %s185 = sadd.s32 %s184, 1
      %p188 = scmp.eq.s32.totalorder %s24, 1
      %p189 = scmp.ne.s32.totalorder %s184, %s186
      %p190 = scmp.eq.s32.totalorder %s24, 0
      %p191 = por %p189, %p190
      %p192 = scmp.ne.s32.totalorder %s184, %s186
      %p193 = scmp.eq.s32.totalorder %s29, 1
      %p194 = por %p192, %p193
      %p195 = scmp.ne.s32.totalorder %s186, %s187
      %p196 = scmp.eq.s32.totalorder %s29, 0
      %p197 = por %p195, %p196
      %p198 = scmp.ne.s32.totalorder %s186, %s187
      %p199 = scmp.eq.s32.totalorder %s30, 1
      %p200 = por %p198, %p199
      %p202 = scmp.ne.s32.totalorder %s187, %s201
      %p203 = scmp.eq.s32.totalorder %s30, 0
      %p204 = por %p202, %p203
      %s206 = sadd.s32 %s205, 1
      %p209 = scmp.eq.s32.totalorder %s24, 1
      %p210 = scmp.ne.s32.totalorder %s205, %s207
      %p211 = scmp.eq.s32.totalorder %s24, 0
      %p212 = por %p210, %p211
      %p213 = scmp.ne.s32.totalorder %s205, %s207
      %p214 = scmp.eq.s32.totalorder %s29, 1
      %p215 = por %p213, %p214
      %p216 = scmp.ne.s32.totalorder %s207, %s208
      %p217 = scmp.eq.s32.totalorder %s29, 0
      %p218 = por %p216, %p217
      %p219 = scmp.ne.s32.totalorder %s207, %s208
      %p220 = scmp.eq.s32.totalorder %s30, 1
      %p221 = por %p219, %p220
      %p223 = scmp.ne.s32.totalorder %s208, %s222
      %p224 = scmp.eq.s32.totalorder %s30, 0
      %p225 = por %p223, %p224
      %s227 = sadd.s32 %s226, 1
      %p230 = scmp.eq.s32.totalorder %s24, 1
      %p231 = scmp.ne.s32.totalorder %s226, %s228
      %p232 = scmp.eq.s32.totalorder %s24, 0
      %p233 = por %p231, %p232
      %p234 = scmp.ne.s32.totalorder %s226, %s228
      %p235 = scmp.eq.s32.totalorder %s29, 1
      %p236 = por %p234, %p235
      %p237 = scmp.ne.s32.totalorder %s228, %s229
      %p238 = scmp.eq.s32.totalorder %s29, 0
      %p239 = por %p237, %p238
      %p240 = scmp.ne.s32.totalorder %s228, %s229
      %p241 = scmp.eq.s32.totalorder %s30, 1
      %p242 = por %p240, %p241
      %p244 = scmp.ne.s32.totalorder %s229, %s243
      %p245 = scmp.eq.s32.totalorder %s30, 0
      %p246 = por %p244, %p245
      %s248 = sadd.s32 %s247, 1
      %p251 = scmp.eq.s32.totalorder %s24, 1
      %p252 = scmp.ne.s32.totalorder %s247, %s249
      %p253 = scmp.eq.s32.totalorder %s24, 0
      %p254 = por %p252, %p253
      %p255 = scmp.ne.s32.totalorder %s247, %s249
      %p256 = scmp.eq.s32.totalorder %s29, 1
      %p257 = por %p255, %p256
      %p258 = scmp.ne.s32.totalorder %s249, %s250
      %p259 = scmp.eq.s32.totalorder %s29, 0
      %p260 = por %p258, %p259
      %p261 = scmp.ne.s32.totalorder %s249, %s250
      %p262 = scmp.eq.s32.totalorder %s30, 1
      %p263 = por %p261, %p262
      %p265 = scmp.ne.s32.totalorder %s250, %s264
      %p266 = scmp.eq.s32.totalorder %s30, 0
      %p267 = por %p265, %p266
      %s269 = sadd.s32 %s268, 1
      %p272 = scmp.eq.s32.totalorder %s24, 1
      %p273 = scmp.ne.s32.totalorder %s268, %s270
      %p274 = scmp.eq.s32.totalorder %s24, 0
      %p275 = por %p273, %p274
      %p276 = scmp.ne.s32.totalorder %s268, %s270
      %p277 = scmp.eq.s32.totalorder %s29, 1
      %p278 = por %p276, %p277
      %p279 = scmp.ne.s32.totalorder %s270, %s271
      %p280 = scmp.eq.s32.totalorder %s29, 0
      %p281 = por %p279, %p280
      %p282 = scmp.ne.s32.totalorder %s270, %s271
      %p283 = scmp.eq.s32.totalorder %s30, 1
      %p284 = por %p282, %p283
      %p286 = scmp.ne.s32.totalorder %s271, %s285
      %p287 = scmp.eq.s32.totalorder %s30, 0
      %p288 = por %p286, %p287
      %s290 = sadd.s32 %s289, 1
      %p293 = scmp.eq.s32.totalorder %s24, 1
      %p294 = scmp.ne.s32.totalorder %s289, %s291
      %p295 = scmp.eq.s32.totalorder %s24, 0
      %p296 = por %p294, %p295
      %p297 = scmp.ne.s32.totalorder %s289, %s291
      %p298 = scmp.eq.s32.totalorder %s29, 1
      %p299 = por %p297, %p298
      %p300 = scmp.ne.s32.totalorder %s291, %s292
      %p301 = scmp.eq.s32.totalorder %s29, 0
      %p302 = por %p300, %p301
      %p303 = scmp.ne.s32.totalorder %s291, %s292
      %p304 = scmp.eq.s32.totalorder %s30, 1
      %p305 = por %p303, %p304
      %p307 = scmp.ne.s32.totalorder %s292, %s306
      %p308 = scmp.eq.s32.totalorder %s30, 0
      %p309 = por %p307, %p308
      %s310 = ssub.s32 %s24, %s31
      %p311 = scmp.eq.s32.totalorder %s310, 0
      %s313 = sadd.s32 %s312, 1
      %s314 = scalar_select %p311, %s312, %s313
      %p317 = pneg %p311
      %p318 = scmp.eq.s32.totalorder %s24, 1
      %p319 = por %p317, %p318
      %p320 = scmp.ne.s32.totalorder %s312, %s315
      %p321 = scmp.eq.s32.totalorder %s24, 0
      %p322 = por %p320, %p321
      %p323 = scmp.ne.s32.totalorder %s312, %s315
      %p324 = scmp.eq.s32.totalorder %s29, 1
      %p325 = por %p323, %p324
      %p326 = scmp.ne.s32.totalorder %s315, %s316
      %p327 = scmp.eq.s32.totalorder %s29, 0
      %p328 = por %p326, %p327
      %p329 = scmp.ne.s32.totalorder %s315, %s316
      %p330 = scmp.eq.s32.totalorder %s30, 1
      %p331 = por %p329, %p330
      %p333 = scmp.ne.s32.totalorder %s316, %s332
      %p334 = scmp.eq.s32.totalorder %s30, 0
      %p335 = por %p333, %p334
      %p336 = scmp.le.s32.totalorder 1, %s24
      %p337 = scmp.lt.s32.totalorder %s24, 3
      %p338 = pnand %p336, %p337
      %p339 = pneg %p338
      // Predicated region
      $region9: #{tpu_custom_call.1} parent=5 // pred_check
        _
      $region10: #{tpu_custom_call.1} parent=5 // pred_check_branch
        %341 = sbr.rel (%p338) target = $region12
      $region11: #{tpu_custom_call.1} parent=5 // pred_region
        %s342 = ssub.s32 %s24, 1
        // Predicated region
        $region13: #{tpu_custom_call.1} parent=11 // pred_check
          %p343 = pneg %p71
        $region14: #{tpu_custom_call.1} parent=11 // pred_check_branch
          %345 = sbr.rel (%p343) target = $region16
        $region15: #{tpu_custom_call.1} parent=11 // pred_region
          %347 = vsyncadd [#allocation3], 0
          %s349 = sshll.u32 %s1, 4
          %s350 = int_to_ptr.hbm [resolvable:$true] %s349
          %s351 = sshll.u32 [#allocation2], 4
          %s352 = int_to_ptr.vmem [resolvable:$true] %s351
          %354 = dma.hbm_to_vmem [thread:$0]  %s350, 16, %s352, [#allocation3]
        $region16: #{tpu_custom_call.1} parent=11 // pred_fallthru
          _
        // Predicated region
        $region17: #{tpu_custom_call.1} parent=11 // pred_check
          %p355 = pneg %p92
        $region18: #{tpu_custom_call.1} parent=11 // pred_check_branch
          %357 = sbr.rel (%p355) target = $region20
        $region19: #{tpu_custom_call.1} parent=11 // pred_region
          _
        $region20: #{tpu_custom_call.1} parent=11 // pred_fallthru
          _
        // Predicated region
        $region21: #{tpu_custom_call.1} parent=11 // pred_check
          %p358 = pneg %p113
        $region22: #{tpu_custom_call.1} parent=11 // pred_check_branch
          %360 = sbr.rel (%p358) target = $region24
        $region23: #{tpu_custom_call.1} parent=11 // pred_region
          _
        $region24: #{tpu_custom_call.1} parent=11 // pred_fallthru
          _
        // Predicated region
        $region25: #{tpu_custom_call.1} parent=11 // pred_check
          %p361 = pneg %p134
        $region26: #{tpu_custom_call.1} parent=11 // pred_check_branch
          %363 = sbr.rel (%p361) target = $region28
        $region27: #{tpu_custom_call.1} parent=11 // pred_region
          _
        $region28: #{tpu_custom_call.1} parent=11 // pred_fallthru
          _
        // Predicated region
        $region29: #{tpu_custom_call.1} parent=11 // pred_check
          %p364 = pneg %p155
        $region30: #{tpu_custom_call.1} parent=11 // pred_check_branch
          %366 = sbr.rel (%p364) target = $region32
        $region31: #{tpu_custom_call.1} parent=11 // pred_region
          _
        $region32: #{tpu_custom_call.1} parent=11 // pred_fallthru
          _
        // Predicated region
        $region33: #{tpu_custom_call.1} parent=11 // pred_check
          %p367 = pneg %p176
        $region34: #{tpu_custom_call.1} parent=11 // pred_check_branch
          %369 = sbr.rel (%p367) target = $region36
        $region35: #{tpu_custom_call.1} parent=11 // pred_region
          _
        $region36: #{tpu_custom_call.1} parent=11 // pred_fallthru
          _
        // Predicated region
        $region37: #{tpu_custom_call.1} parent=11 // pred_check
          %p370 = pneg %p197
        $region38: #{tpu_custom_call.1} parent=11 // pred_check_branch
          %372 = sbr.rel (%p370) target = $region40
        $region39: #{tpu_custom_call.1} parent=11 // pred_region
          _
        $region40: #{tpu_custom_call.1} parent=11 // pred_fallthru
          _
        // Predicated region
        $region41: #{tpu_custom_call.1} parent=11 // pred_check
          %p373 = pneg %p218
        $region42: #{tpu_custom_call.1} parent=11 // pred_check_branch
          %375 = sbr.rel (%p373) target = $region44
        $region43: #{tpu_custom_call.1} parent=11 // pred_region
          _
        $region44: #{tpu_custom_call.1} parent=11 // pred_fallthru
          _
        // Predicated region
        $region45: #{tpu_custom_call.1} parent=11 // pred_check
          %p376 = pneg %p239
        $region46: #{tpu_custom_call.1} parent=11 // pred_check_branch
          %378 = sbr.rel (%p376) target = $region48
        $region47: #{tpu_custom_call.1} parent=11 // pred_region
          %380 = vsyncadd [#allocation6], 0
          %s381 = sshll.u32 %s9, 4
          %s382 = int_to_ptr.hbm [resolvable:$true] %s381
          %s383 = sshll.u32 [#allocation5], 4
          %s384 = int_to_ptr.vmem [resolvable:$true] %s383
          %389 = dma.hbm_to_vmem [thread:$0]  %s382, 256, %s384, [#allocation6], 64, 64, 4
        $region48: #{tpu_custom_call.1} parent=11 // pred_fallthru
          _
        // Predicated region
        $region49: #{tpu_custom_call.1} parent=11 // pred_check
          %p390 = pneg %p260
        $region50: #{tpu_custom_call.1} parent=11 // pred_check_branch
          %392 = sbr.rel (%p390) target = $region52
        $region51: #{tpu_custom_call.1} parent=11 // pred_region
          _
        $region52: #{tpu_custom_call.1} parent=11 // pred_fallthru
          _
        // Predicated region
        $region53: #{tpu_custom_call.1} parent=11 // pred_check
          %p393 = pneg %p281
        $region54: #{tpu_custom_call.1} parent=11 // pred_check_branch
          %395 = sbr.rel (%p393) target = $region56
        $region55: #{tpu_custom_call.1} parent=11 // pred_region
          _
        $region56: #{tpu_custom_call.1} parent=11 // pred_fallthru
          _
        // Predicated region
        $region57: #{tpu_custom_call.1} parent=11 // pred_check
          %p396 = pneg %p302
        $region58: #{tpu_custom_call.1} parent=11 // pred_check_branch
          %398 = sbr.rel (%p396) target = $region60
        $region59: #{tpu_custom_call.1} parent=11 // pred_region
          _
        $region60: #{tpu_custom_call.1} parent=11 // pred_fallthru
          _
      $region12: #{tpu_custom_call.1} parent=5 // pred_fallthru
        _
      %p399 = scmp.lt.s32.totalorder %s24, 2
      // Predicated region
      $region61: #{tpu_custom_call.1} parent=5 // pred_check
        %p400 = pneg %p399
      $region62: #{tpu_custom_call.1} parent=5 // pred_check_branch
        %402 = sbr.rel (%p400) target = $region64
      $region63: #{tpu_custom_call.1} parent=5 // pred_region
        // Predicated region
        $region65: #{tpu_custom_call.1} parent=63 // pred_check
          %p403 = pneg %p44
        $region66: #{tpu_custom_call.1} parent=63 // pred_check_branch
          %405 = sbr.rel (%p403) target = $region68
        $region67: #{tpu_custom_call.1} parent=63 // pred_region
          %p406 = scmp.lt.s32.totalorder %s24, 1
          %s407 = scalar_select %p406, %s24, 1
          %s408 = smul.addr %s407, 8
          %s409 = scalar_lea.vmem %s0, %s408
        $region68: #{tpu_custom_call.1} parent=63 // pred_fallthru
          _
      $region64: #{tpu_custom_call.1} parent=5 // pred_fallthru
        _
      %p410 = scmp.le.s32.totalorder 1, %s24
      %p411 = scmp.lt.s32.totalorder %s24, 3
      %p412 = pnand %p410, %p411
      %p413 = pneg %p412
      // Predicated region
      $region69: #{tpu_custom_call.1} parent=5 // pred_check
        _
      $region70: #{tpu_custom_call.1} parent=5 // pred_check_branch
        %415 = sbr.rel (%p412) target = $region72
      $region71: #{tpu_custom_call.1} parent=5 // pred_region
        %s416 = ssub.s32 %s24, 1
        // Predicated region
        $region73: #{tpu_custom_call.1} parent=71 // pred_check
          %p417 = pneg %p71
        $region74: #{tpu_custom_call.1} parent=71 // pred_check_branch
          %419 = sbr.rel (%p417) target = $region76
        $region75: #{tpu_custom_call.1} parent=71 // pred_region
          %421 = dma.done [#allocation3], 16
        $region76: #{tpu_custom_call.1} parent=71 // pred_fallthru
          _
        // Predicated region
        $region77: #{tpu_custom_call.1} parent=71 // pred_check
          %p422 = pneg %p239
        $region78: #{tpu_custom_call.1} parent=71 // pred_check_branch
          %424 = sbr.rel (%p422) target = $region80
        $region79: #{tpu_custom_call.1} parent=71 // pred_region
          %426 = dma.done [#allocation6], 256
        $region80: #{tpu_custom_call.1} parent=71 // pred_fallthru
          _
        %p427 = scmp.lt.s32.totalorder %s29, 1
        %s428 = scalar_select %p427, %s29, 1
        %s429 = smul.addr %s428, 8
        %s430 = scalar_lea.vmem %s0, %s429
        %p431 = pneg %p50
        %p432 = pneg %p47
        %p433 = pneg %p71
        %p434 = pneg %p68
        %p435 = pneg %p92
        %p436 = pneg %p89
        %p437 = pneg %p113
        %p438 = pneg %p110
        %p439 = pneg %p134
        %p440 = pneg %p131
        %p441 = pneg %p155
        %p442 = pneg %p152
        %p443 = pneg %p176
        %p444 = pneg %p173
        %p445 = pneg %p197
        %p446 = pneg %p194
        %p447 = pneg %p218
        %p448 = pneg %p215
        %p449 = pneg %p239
        %p450 = pneg %p236
        %p451 = pneg %p260
        %p452 = pneg %p257
        %p453 = pneg %p281
        %p454 = pneg %p278
        %p455 = pneg %p302
        %p456 = pneg %p299
        %p457 = pneg %p328
        %p458 = pneg %p325
        %s459 = sand.u32 %s315, 1
        %s460 = scalar_lea.sflag [#allocation4], %s459
        %s461 = sand.u32 %s315, 1
        %s462 = smul.addr %s461, 8
        %s463 = scalar_lea.vmem [#allocation7], %s462
        %p464 = scmp.lt.s32.totalorder %s29, 1
        %s465 = scalar_select %p464, %s29, 1
        %s466 = smul.addr %s465, 8
        %s467 = scalar_lea.vmem %s0, %s466
        %v469 = vld [vmem:[%s467] sm:$0xff]
        %v470 = vld [vmem:[#allocation2] sm:$0x1]
        %v471 = vld [vmem:[%s2] sm:$0x1]
        %vm472 = vcmask 261120
        %v473 = vsel %vm472, %v469, 0.0
        %474 = vadd.xlane.f32.xlu0 %v473
        %v475 = vpop.xlane.xlu0 %474
        %v476 = vrcp.pop 32.0
        %v477 = vmul.f32 32.0, %v476
        %v478 = vsub.f32 1.0, %v477
        %v479 = vmul.f32 %v476, %v478
        %v480 = vadd.f32 %v476, %v479
        %vm481 = vweird.f32 %v476
        %v482 = vsel %vm481, %v476, %v480
        %v483 = vmul.f32 %v475, %v482
        %v484 = vsub.f32 %v469, %v483
        %v485 = vmul.f32 %v484, %v484
        %v486 = vsel %vm472, %v485, 0.0
        %487 = vadd.xlane.f32.xlu0 %v486
        %v488 = vpop.xlane.xlu0 %487
        %v489 = vmul.f32 %v488, %v482
        %v490 = vadd.f32 %v489, 1e-05
        %v491 = vrsqrt.pop %v490
        %v492 = vmul.f32 %v491, %v490
        %v493 = vmul.f32 %v492, %v491
        %v494 = vmul.f32 0.5, %v493
        %v495 = vsub.f32 1.5, %v494
        %v496 = vmul.f32 %v491, %v495
        %vm497 = vweird.f32 %v490
        %vm498 = vweird.f32 %v491
        %vm499 = vmor %vm497, %vm498
        %v500 = vsel %vm499, %v491, %v496
        %v501 = vmul.f32 %v484, %v500
        %v503 = vperm.slane %v470, 0
        %v505 = vmul.f32 %v501, %v503
        %v507 = vperm.slane %v471, 0
        %v509 = vadd.f32 %v505, %v507
        %v510 = vpack.c.bf16 %v509, %v509
        %v511 = vld [vmem:[%s3] sm:$0xf]
        %v512 = vld [vmem:[%s3 + $0x4] sm:$0xf]
        %v513 = vld [vmem:[%s3 + $0x8] sm:$0xf]
        %v514 = vld [vmem:[%s3 + $0xc] sm:$0xf]
        %v515 = vld [vmem:[%s4] sm:$0x1]
        %v517 = vperm.slane %v515, 0
        %v523 = vunpack.c.l.b16 %v511
        %v524 = vunpack.c.l.b16 %v512
        %v525 = vunpack.c.l.b16 %v513
        %v526 = vunpack.c.l.b16 %v514
        %v527 = vpack.c.b16 %v524, %v523
        %v528 = vpack.c.b16 %v526, %v525
        %v532 = vsel %vm472, %v510, 0
        %534 = vmatpush.bf16.msra.mxu0 0
        %535 = vmatpush.bf16.msra.mxu0 0
        %536 = vmatpush.bf16.msra.mxu0 0
        %537 = vmatpush.bf16.msra.mxu0 0
        %538 = vmatpush.bf16.msra.mxu0 0
        %539 = vmatpush.bf16.msra.mxu0 0
        %540 = vmatpush.bf16.msra.mxu0 %v528
        %541 = vmatpush.bf16.msra.mxu0 %v527
        %542 = vmatmul.bf16.gmra.mxu0 %v532
        %v543 = vpop.f32.mrf.mxu0
        %v544 = vadd.f32 %v517, %v543
        %v545 = vpop.f32.mrf.mxu0
        %546 = vdwg.mxu0
        %v547 = vpack.c.bf16 %v544, %v544
        %v548 = vld [vmem:[%s5] sm:$0xf]
        %v549 = vld [vmem:[%s5 + $0x4] sm:$0xf]
        %v550 = vld [vmem:[%s5 + $0x8] sm:$0xf]
        %v551 = vld [vmem:[%s5 + $0xc] sm:$0xf]
        %v552 = vld [vmem:[%s6] sm:$0x1]
        %v554 = vperm.slane %v552, 0
        %v556 = vadd.f32 %v469, %v554
        %v558 = vunpack.c.l.b16 %v547
        %v559 = vpack.c.b16 %v558, %v558
        %560 = vrot.lane.b32.xlu0 %v559, 96
        %v561 = vpop.permute.xlu0 %560
        %vm562 = vcmask 64512
        %v564 = vsel %vm562, %v547, 0
        %v567 = vsel %vm562, %v561, 0
        %569 = vmatpush.bf16.xpose.msra.mxu0 0
        %570 = vmatpush.bf16.xpose.msra.mxu0 0
        %571 = vmatpush.bf16.xpose.msra.mxu0 0
        %572 = vmatpush.bf16.xpose.msra.mxu0 0
        %573 = vmatpush.bf16.xpose.msra.mxu0 0
        %574 = vmatpush.bf16.xpose.msra.mxu0 0
        %575 = vmatpush.bf16.xpose.msra.mxu0 0
        %576 = vmatpush.bf16.xpose.msra.mxu0 %v567
        %577 = vmatmul.bf16.gmra.mxu0 %v564
        %v578 = vpop.f32.mrf.mxu0
        %v579 = vadd.f32 0.0, %v578
        %v580 = vpop.f32.mrf.mxu0
        %581 = vdwg.mxu0
        %v582 = vmul.f32 %v579, 0.35355338
        %v583 = vsel %vm562, %v582, -inf
        %584 = vmax.xlane.f32.xlu0 %v583
        %v585 = vpop.xlane.xlu0 %584
        %v586 = vsub.f32 %v582, %v585
        %v587 = vmul.f32 %v586, 1.442695
        %v588 = vpow.pop %v587
        %v589 = vsel %vm562, %v588, 0.0
        %590 = vadd.xlane.f32.xlu0 %v589
        %v591 = vpop.xlane.xlu0 %590
        %v592 = vrcp.pop %v591
        %v593 = vmul.f32 %v588, %v592
        %v594 = vpack.c.bf16 %v593, %v593
        %595 = vrot.lane.b32.xlu0 %v559, 64
        %v596 = vpop.permute.xlu0 %595
        %v598 = vsel %vm562, %v594, 0
        %vm600 = vcmask 1043456
        %v602 = vsel %vm600, %v596, 0
        %604 = vmatpush.bf16.msra.mxu0 0
        %605 = vmatpush.bf16.msra.mxu0 0
        %606 = vmatpush.bf16.msra.mxu0 0
        %607 = vmatpush.bf16.msra.mxu0 0
        %608 = vmatpush.bf16.msra.mxu0 0
        %609 = vmatpush.bf16.msra.mxu0 0
        %610 = vmatpush.bf16.msra.mxu0 0
        %611 = vmatpush.bf16.msra.mxu0 %v602
        %612 = vmatmul.bf16.gmra.mxu0 %v598
        %v613 = vpop.f32.mrf.mxu0
        %v614 = vadd.f32 0.0, %v613
        %v615 = vpop.f32.mrf.mxu0
        %616 = vdwg.mxu0
        %v617 = vpack.c.bf16 %v614, %v614
        %v619 = vsel %vm562, %v617, 0
        %v622 = vsel %vm600, %v548, 0
        %624 = vmatpush.bf16.msra.mxu0 0
        %625 = vmatpush.bf16.msra.mxu0 0
        %626 = vmatpush.bf16.msra.mxu0 0
        %627 = vmatpush.bf16.msra.mxu0 0
        %628 = vmatpush.bf16.msra.mxu0 0
        %629 = vmatpush.bf16.msra.mxu0 0
        %630 = vmatpush.bf16.msra.mxu0 0
        %631 = vmatpush.bf16.msra.mxu0 %v622
        %632 = vmatmul.bf16.gmra.mxu0 %v619
        %v633 = vpop.f32.mrf.mxu0
        %v634 = vadd.f32 0.0, %v633
        %v635 = vpop.f32.mrf.mxu0
        %636 = vdwg.mxu0
        %v637 = vadd.f32 %v556, %v634
        %638 = vrot.lane.b32.xlu0 %v559, 120
        %v639 = vpop.permute.xlu0 %638
        %640 = vrot.lane.b32.xlu0 %v559, 88
        %v641 = vpop.permute.xlu0 %640
        %v643 = vsel %vm562, %v639, 0
        %v646 = vsel %vm562, %v641, 0
        %648 = vmatpush.bf16.xpose.msra.mxu0 0
        %649 = vmatpush.bf16.xpose.msra.mxu0 0
        %650 = vmatpush.bf16.xpose.msra.mxu0 0
        %651 = vmatpush.bf16.xpose.msra.mxu0 0
        %652 = vmatpush.bf16.xpose.msra.mxu0 0
        %653 = vmatpush.bf16.xpose.msra.mxu0 0
        %654 = vmatpush.bf16.xpose.msra.mxu0 0
        %655 = vmatpush.bf16.xpose.msra.mxu0 %v646
        %656 = vmatmul.bf16.gmra.mxu0 %v643
        %v657 = vpop.f32.mrf.mxu0
        %v658 = vadd.f32 0.0, %v657
        %v659 = vpop.f32.mrf.mxu0
        %660 = vdwg.mxu0
        %v661 = vmul.f32 %v658, 0.35355338
        %v662 = vsel %vm562, %v661, -inf
        %663 = vmax.xlane.f32.xlu0 %v662
        %v664 = vpop.xlane.xlu0 %663
        %v665 = vsub.f32 %v661, %v664
        %v666 = vmul.f32 %v665, 1.442695
        %v667 = vpow.pop %v666
        %v668 = vsel %vm562, %v667, 0.0
        %669 = vadd.xlane.f32.xlu0 %v668
        %v670 = vpop.xlane.xlu0 %669
        %v671 = vrcp.pop %v670
        %v672 = vmul.f32 %v667, %v671
        %v673 = vpack.c.bf16 %v672, %v672
        %674 = vrot.lane.b32.xlu0 %v559, 56
        %v675 = vpop.permute.xlu0 %674
        %v677 = vsel %vm562, %v673, 0
        %v680 = vsel %vm600, %v675, 0
        %682 = vmatpush.bf16.msra.mxu0 0
        %683 = vmatpush.bf16.msra.mxu0 0
        %684 = vmatpush.bf16.msra.mxu0 0
        %685 = vmatpush.bf16.msra.mxu0 0
        %686 = vmatpush.bf16.msra.mxu0 0
        %687 = vmatpush.bf16.msra.mxu0 0
        %688 = vmatpush.bf16.msra.mxu0 0
        %689 = vmatpush.bf16.msra.mxu0 %v680
        %690 = vmatmul.bf16.gmra.mxu0 %v677
        %v691 = vpop.f32.mrf.mxu0
        %v692 = vadd.f32 0.0, %v691
        %v693 = vpop.f32.mrf.mxu0
        %694 = vdwg.mxu0
        %v695 = vpack.c.bf16 %v692, %v692
        %v697 = vsel %vm562, %v695, 0
        %v700 = vsel %vm600, %v549, 0
        %702 = vmatpush.bf16.msra.mxu0 0
        %703 = vmatpush.bf16.msra.mxu0 0
        %704 = vmatpush.bf16.msra.mxu0 0
        %705 = vmatpush.bf16.msra.mxu0 0
        %706 = vmatpush.bf16.msra.mxu0 0
        %707 = vmatpush.bf16.msra.mxu0 0
        %708 = vmatpush.bf16.msra.mxu0 0
        %709 = vmatpush.bf16.msra.mxu0 %v700
        %710 = vmatmul.bf16.gmra.mxu0 %v697
        %v711 = vpop.f32.mrf.mxu0
        %v712 = vadd.f32 0.0, %v711
        %v713 = vpop.f32.mrf.mxu0
        %714 = vdwg.mxu0
        %v715 = vadd.f32 %v637, %v712
        %716 = vrot.lane.b32.xlu0 %v559, 112
        %v717 = vpop.permute.xlu0 %716
        %718 = vrot.lane.b32.xlu0 %v559, 80
        %v719 = vpop.permute.xlu0 %718
        %v721 = vsel %vm562, %v717, 0
        %v724 = vsel %vm562, %v719, 0
        %726 = vmatpush.bf16.xpose.msra.mxu0 0
        %727 = vmatpush.bf16.xpose.msra.mxu0 0
        %728 = vmatpush.bf16.xpose.msra.mxu0 0
        %729 = vmatpush.bf16.xpose.msra.mxu0 0
        %730 = vmatpush.bf16.xpose.msra.mxu0 0
        %731 = vmatpush.bf16.xpose.msra.mxu0 0
        %732 = vmatpush.bf16.xpose.msra.mxu0 0
        %733 = vmatpush.bf16.xpose.msra.mxu0 %v724
        %734 = vmatmul.bf16.gmra.mxu0 %v721
        %v735 = vpop.f32.mrf.mxu0
        %v736 = vadd.f32 0.0, %v735
        %v737 = vpop.f32.mrf.mxu0
        %738 = vdwg.mxu0
        %v739 = vmul.f32 %v736, 0.35355338
        %v740 = vsel %vm562, %v739, -inf
        %741 = vmax.xlane.f32.xlu0 %v740
        %v742 = vpop.xlane.xlu0 %741
        %v743 = vsub.f32 %v739, %v742
        %v744 = vmul.f32 %v743, 1.442695
        %v745 = vpow.pop %v744
        %v746 = vsel %vm562, %v745, 0.0
        %747 = vadd.xlane.f32.xlu0 %v746
        %v748 = vpop.xlane.xlu0 %747
        %v749 = vrcp.pop %v748
        %v750 = vmul.f32 %v745, %v749
        %v751 = vpack.c.bf16 %v750, %v750
        %752 = vrot.lane.b32.xlu0 %v559, 48
        %v753 = vpop.permute.xlu0 %752
        %v755 = vsel %vm562, %v751, 0
        %v758 = vsel %vm600, %v753, 0
        %760 = vmatpush.bf16.msra.mxu0 0
        %761 = vmatpush.bf16.msra.mxu0 0
        %762 = vmatpush.bf16.msra.mxu0 0
        %763 = vmatpush.bf16.msra.mxu0 0
        %764 = vmatpush.bf16.msra.mxu0 0
        %765 = vmatpush.bf16.msra.mxu0 0
        %766 = vmatpush.bf16.msra.mxu0 0
        %767 = vmatpush.bf16.msra.mxu0 %v758
        %768 = vmatmul.bf16.gmra.mxu0 %v755
        %v769 = vpop.f32.mrf.mxu0
        %v770 = vadd.f32 0.0, %v769
        %v771 = vpop.f32.mrf.mxu0
        %772 = vdwg.mxu0
        %v773 = vpack.c.bf16 %v770, %v770
        %v775 = vsel %vm562, %v773, 0
        %v778 = vsel %vm600, %v550, 0
        %780 = vmatpush.bf16.msra.mxu0 0
        %781 = vmatpush.bf16.msra.mxu0 0
        %782 = vmatpush.bf16.msra.mxu0 0
        %783 = vmatpush.bf16.msra.mxu0 0
        %784 = vmatpush.bf16.msra.mxu0 0
        %785 = vmatpush.bf16.msra.mxu0 0
        %786 = vmatpush.bf16.msra.mxu0 0
        %787 = vmatpush.bf16.msra.mxu0 %v778
        %788 = vmatmul.bf16.gmra.mxu0 %v775
        %v789 = vpop.f32.mrf.mxu0
        %v790 = vadd.f32 0.0, %v789
        %v791 = vpop.f32.mrf.mxu0
        %792 = vdwg.mxu0
        %v793 = vadd.f32 %v715, %v790
        %794 = vrot.lane.b32.xlu0 %v559, 104
        %v795 = vpop.permute.xlu0 %794
        %796 = vrot.lane.b32.xlu0 %v559, 72
        %v797 = vpop.permute.xlu0 %796
        %v799 = vsel %vm562, %v795, 0
        %v802 = vsel %vm562, %v797, 0
        %804 = vmatpush.bf16.xpose.msra.mxu0 0
        %805 = vmatpush.bf16.xpose.msra.mxu0 0
        %806 = vmatpush.bf16.xpose.msra.mxu0 0
        %807 = vmatpush.bf16.xpose.msra.mxu0 0
        %808 = vmatpush.bf16.xpose.msra.mxu0 0
        %809 = vmatpush.bf16.xpose.msra.mxu0 0
        %810 = vmatpush.bf16.xpose.msra.mxu0 0
        %811 = vmatpush.bf16.xpose.msra.mxu0 %v802
        %812 = vmatmul.bf16.gmra.mxu0 %v799
        %v813 = vpop.f32.mrf.mxu0
        %v814 = vadd.f32 0.0, %v813
        %v815 = vpop.f32.mrf.mxu0
        %816 = vdwg.mxu0
        %v817 = vmul.f32 %v814, 0.35355338
        %v818 = vsel %vm562, %v817, -inf
        %819 = vmax.xlane.f32.xlu0 %v818
        %v820 = vpop.xlane.xlu0 %819
        %v821 = vsub.f32 %v817, %v820
        %v822 = vmul.f32 %v821, 1.442695
        %v823 = vpow.pop %v822
        %v824 = vsel %vm562, %v823, 0.0
        %825 = vadd.xlane.f32.xlu0 %v824
        %v826 = vpop.xlane.xlu0 %825
        %v827 = vrcp.pop %v826
        %v828 = vmul.f32 %v823, %v827
        %v829 = vpack.c.bf16 %v828, %v828
        %830 = vrot.lane.b32.xlu0 %v559, 40
        %v831 = vpop.permute.xlu0 %830
        %v833 = vsel %vm562, %v829, 0
        %v836 = vsel %vm600, %v831, 0
        %838 = vmatpush.bf16.msra.mxu0 0
        %839 = vmatpush.bf16.msra.mxu0 0
        %840 = vmatpush.bf16.msra.mxu0 0
        %841 = vmatpush.bf16.msra.mxu0 0
        %842 = vmatpush.bf16.msra.mxu0 0
        %843 = vmatpush.bf16.msra.mxu0 0
        %844 = vmatpush.bf16.msra.mxu0 0
        %845 = vmatpush.bf16.msra.mxu0 %v836
        %846 = vmatmul.bf16.gmra.mxu0 %v833
        %v847 = vpop.f32.mrf.mxu0
        %v848 = vadd.f32 0.0, %v847
        %v849 = vpop.f32.mrf.mxu0
        %850 = vdwg.mxu0
        %v851 = vpack.c.bf16 %v848, %v848
        %v853 = vsel %vm562, %v851, 0
        %v856 = vsel %vm600, %v551, 0
        %858 = vmatpush.bf16.msra.mxu0 0
        %859 = vmatpush.bf16.msra.mxu0 0
        %860 = vmatpush.bf16.msra.mxu0 0
        %861 = vmatpush.bf16.msra.mxu0 0
        %862 = vmatpush.bf16.msra.mxu0 0
        %863 = vmatpush.bf16.msra.mxu0 0
        %864 = vmatpush.bf16.msra.mxu0 0
        %865 = vmatpush.bf16.msra.mxu0 %v856
        %866 = vmatmul.bf16.gmra.mxu0 %v853
        %v867 = vpop.f32.mrf.mxu0
        %v868 = vadd.f32 0.0, %v867
        %v869 = vpop.f32.mrf.mxu0
        %870 = vdwg.mxu0
        %v871 = vadd.f32 %v793, %v868
        %v872 = vld [vmem:[%s7] sm:$0x1]
        %v873 = vld [vmem:[%s8] sm:$0x1]
        %v874 = vsel %vm472, %v871, 0.0
        %875 = vadd.xlane.f32.xlu0 %v874
        %v876 = vpop.xlane.xlu0 %875
        %v877 = vmul.f32 %v876, %v482
        %v878 = vsub.f32 %v871, %v877
        %v879 = vmul.f32 %v878, %v878
        %v880 = vsel %vm472, %v879, 0.0
        %881 = vadd.xlane.f32.xlu0 %v880
        %v882 = vpop.xlane.xlu0 %881
        %v883 = vmul.f32 %v882, %v482
        %v884 = vadd.f32 %v883, 1e-05
        %v885 = vrsqrt.pop %v884
        %v886 = vmul.f32 %v885, %v884
        %v887 = vmul.f32 %v886, %v885
        %v888 = vmul.f32 0.5, %v887
        %v889 = vsub.f32 1.5, %v888
        %v890 = vmul.f32 %v885, %v889
        %vm891 = vweird.f32 %v884
        %vm892 = vweird.f32 %v885
        %vm893 = vmor %vm891, %vm892
        %v894 = vsel %vm893, %v885, %v890
        %v895 = vmul.f32 %v878, %v894
        %v897 = vperm.slane %v872, 0
        %v899 = vmul.f32 %v895, %v897
        %v901 = vperm.slane %v873, 0
        %v903 = vadd.f32 %v899, %v901
        %v904 = vpack.c.bf16 %v903, %v903
        %v905 = vld [vmem:[#allocation5] sm:$0xf]
        %v906 = vld [vmem:[#allocation5 + $0x4] sm:$0xf]
        %v907 = vld [vmem:[#allocation5 + $0x8] sm:$0xf]
        %v908 = vld [vmem:[#allocation5 + $0xc] sm:$0xf]
        %v909 = vld [vmem:[%s10] sm:$0x1]
        %v911 = vperm.slane %v909, 0
        %v917 = vunpack.c.l.b16 %v905
        %v918 = vunpack.c.l.b16 %v906
        %v919 = vunpack.c.l.b16 %v907
        %v920 = vunpack.c.l.b16 %v908
        %v921 = vpack.c.b16 %v918, %v917
        %v922 = vpack.c.b16 %v920, %v919
        %v926 = vsel %vm472, %v904, 0
        %928 = vmatpush.bf16.msra.mxu0 0
        %929 = vmatpush.bf16.msra.mxu0 0
        %930 = vmatpush.bf16.msra.mxu0 0
        %931 = vmatpush.bf16.msra.mxu0 0
        %932 = vmatpush.bf16.msra.mxu0 0
        %933 = vmatpush.bf16.msra.mxu0 0
        %934 = vmatpush.bf16.msra.mxu0 %v922
        %935 = vmatpush.bf16.msra.mxu0 %v921
        %936 = vmatmul.bf16.gmra.mxu0 %v926
        %v937 = vpop.f32.mrf.mxu0
        %v938 = vadd.f32 %v911, %v937
        %v939 = vpop.f32.mrf.mxu0
        %940 = vdwg.mxu0
        %v941 = vmul.f32 %v938, 0.5
        %v942 = vmul.f32 %v938, 0.044715
        %v943 = vmul.f32 %v942, %v938
        %v944 = vmul.f32 %v943, %v938
        %v945 = vadd.f32 %v938, %v944
        %v946 = vmul.f32 %v945, 0.7978846
        %v947 = vtanh.pop %v946
        %v948 = vadd.f32 %v947, 1.0
        %v949 = vmul.f32 %v941, %v948
        %v950 = vpack.c.bf16 %v949, %v949
        %v951 = vld [vmem:[%s11] sm:$0xf]
        %v952 = vld [vmem:[%s11 + $0x4] sm:$0xf]
        %v953 = vld [vmem:[%s11 + $0x8] sm:$0xf]
        %v954 = vld [vmem:[%s11 + $0xc] sm:$0xf]
        %v955 = vld [vmem:[%s11 + $0x10] sm:$0xf]
        %v956 = vld [vmem:[%s11 + $0x14] sm:$0xf]
        %v957 = vld [vmem:[%s11 + $0x18] sm:$0xf]
        %v958 = vld [vmem:[%s11 + $0x1c] sm:$0xf]
        %v959 = vld [vmem:[%s12] sm:$0x1]
        %v961 = vperm.slane %v959, 0
        %v971 = vunpack.c.l.b16 %v951
        %v972 = vunpack.c.l.b16 %v952
        %v973 = vunpack.c.l.b16 %v953
        %v974 = vunpack.c.l.b16 %v954
        %v975 = vunpack.c.l.b16 %v955
        %v976 = vunpack.c.l.b16 %v956
        %v977 = vunpack.c.l.b16 %v957
        %v978 = vunpack.c.l.b16 %v958
        %v979 = vpack.c.b16 %v972, %v971
        %v980 = vpack.c.b16 %v974, %v973
        %v981 = vpack.c.b16 %v976, %v975
        %v982 = vpack.c.b16 %v978, %v977
        %vm987 = vcmask 523264
        %v989 = vsel %vm987, %v950, 0
        %991 = vmatpush.bf16.msra.mxu0 0
        %992 = vmatpush.bf16.msra.mxu0 0
        %993 = vmatpush.bf16.msra.mxu0 0
        %994 = vmatpush.bf16.msra.mxu0 0
        %995 = vmatpush.bf16.msra.mxu0 %v982
        %996 = vmatpush.bf16.msra.mxu0 %v981
        %997 = vmatpush.bf16.msra.mxu0 %v980
        %998 = vmatpush.bf16.msra.mxu0 %v979
        %999 = vmatmul.bf16.gmra.mxu0 %v989
        %v1000 = vpop.f32.mrf.mxu0
        %v1001 = vadd.f32 %v961, %v1000
        %v1002 = vpop.f32.mrf.mxu0
        %1003 = vdwg.mxu0
        %v1004 = vadd.f32 %v871, %v1001
        %1005 = vst.msk [vmem:[%s463] sm:$0xff] %vm472, %v1004
        %s1006 = sand.u32 %s315, 1
        %s1007 = scalar_lea.sflag [#allocation4], %s1006
        %s1008 = sand.u32 %s315, 1
        %s1009 = smul.addr %s1008, 8
        %s1010 = scalar_lea.vmem [#allocation7], %s1009
        // Predicated region
        $region81: #{tpu_custom_call.1} parent=71 // pred_check
          %p1011 = pneg %p325
        $region82: #{tpu_custom_call.1} parent=71 // pred_check_branch
          %1013 = sbr.rel (%p1011) target = $region84
        $region83: #{tpu_custom_call.1} parent=71 // pred_region
          %1015 = vsyncadd %s1007, 0
          %s1016 = smul.addr %s29, 8
          %s1017 = scalar_lea.hbm %s13, %s1016
          %s1019 = sshll.u32 %s1010, 4
          %s1020 = int_to_ptr.vmem [resolvable:$true] %s1019
          %s1021 = sshll.u32 %s1017, 4
          %s1022 = int_to_ptr.hbm [resolvable:$true] %s1021
          %1024 = dma.vmem_to_hbm [thread:$0]  %s1020, 128, %s1022, %s1007
        $region84: #{tpu_custom_call.1} parent=71 // pred_fallthru
          _
      $region72: #{tpu_custom_call.1} parent=5 // pred_fallthru
        _
      %p1025 = scmp.le.s32.totalorder 2, %s24
      // Predicated region
      $region85: #{tpu_custom_call.1} parent=5 // pred_check
        %p1026 = pneg %p1025
      $region86: #{tpu_custom_call.1} parent=5 // pred_check_branch
        %1028 = sbr.rel (%p1026) target = $region88
      $region87: #{tpu_custom_call.1} parent=5 // pred_region
        %s1029 = ssub.s32 %s24, 2
        // Predicated region
        $region89: #{tpu_custom_call.1} parent=87 // pred_check
          %p1030 = pneg %p331
        $region90: #{tpu_custom_call.1} parent=87 // pred_check_branch
          %1032 = sbr.rel (%p1030) target = $region92
        $region91: #{tpu_custom_call.1} parent=87 // pred_region
          %s1033 = sand.u32 %s316, 1
          %s1034 = scalar_lea.sflag [#allocation4], %s1033
          %s1035 = sand.u32 %s316, 1
          %s1036 = smul.addr %s1035, 8
          %s1037 = scalar_lea.vmem [#allocation7], %s1036
          %1039 = dma.done %s1034, 128
        $region92: #{tpu_custom_call.1} parent=87 // pred_fallthru
          _
      $region88: #{tpu_custom_call.1} parent=5 // pred_fallthru
        _
    $region6: #{tpu_custom_call.1} parent=1 // loop_footer
      %s28 = sadd.s32 1, %s24
    $region7: #{tpu_custom_call.1} parent=1 // loop_footer_branch
      %23 = sbr.rel target = $region3
    $region8: #{tpu_custom_call.1} parent=1 // loop_exit
      _
    %1040 = vsyncpa [#allocation3], 1
    %s1041 = scalar_lea.sflag [#allocation3], 1
    %1042 = vsyncpa %s1041, 1
    %1043 = vsyncpa [#allocation6], 1
    %1044 = vsyncpa [#allocation4], 1
    %s1045 = scalar_lea.sflag [#allocation4], 1
    %1046 = vsyncpa %s1045, 1

</llo_original>
